<compile_context>
chip_gen: v6e
topology: v6e:2x2x1
jax: 0.10.0
libtpu: 0.0.40
codegen_flags: <defaults>
</compile_context>

<pallas_src>
import functools

import jax
import jax.numpy as jnp
from jax import lax
from jax.experimental import pallas as pl
from jax.experimental.pallas import tpu as pltpu


def _round_up(x, m):
    return ((x + m - 1) // m) * m


def lstm_kernel(x_ref, wih_ref, whh_ref, b_ref, wout_ref, bout_ref,
                out_ref, rout_ref, g_sc, *, seq_len, bp, hp, num_labels):
    T, BP, HP = seq_len, bp, hp

    # ---- Phase 1: hoisted input projection (one big bf16 MXU matmul) ------
    # x arrives f32; cast to bf16 on the VPU here.  Bias folded in.  Result
    # (all T steps of gate pre-activations) lands in a VMEM scratch in f32.
    x_bf = x_ref[...].astype(jnp.bfloat16)                       # (T*BP, EP)
    g_sc[...] = (jnp.dot(x_bf, wih_ref[...],
                         preferred_element_type=jnp.float32)
                 + b_ref[...])                                   # (T*BP, 4*HP)

    # Recurrent weights stay f32 (fidelity of the carried c/h state over T);
    # hoisted out of the loop.
    whh = whh_ref[...]                                           # (HP, 4*HP)

    # ---- Phase 2: recurrence over time (fully unrolled in-kernel loop) ----
    def step(t, carry):
        h, c, m = carry                                          # (BP, HP) f32
        start = pl.multiple_of(t * BP, BP)                       # BP = 8
        g_t = g_sc[pl.ds(start, BP), :]                          # full-tile read
        gates = g_t + jnp.dot(h, whh, preferred_element_type=jnp.float32)

        # Each gate occupies its own 128-lane block -> slices are vreg-aligned
        # (no cross-lane relayout on the critical path).  PyTorch order i,f,g,o.
        i_g = jax.nn.sigmoid(gates[:, 0 * HP:1 * HP])
        f_g = jax.nn.sigmoid(gates[:, 1 * HP:2 * HP])
        g_g = jnp.tanh(gates[:, 2 * HP:3 * HP])
        o_g = jax.nn.sigmoid(gates[:, 3 * HP:4 * HP])

        c_new = f_g * c + i_g * g_g
        h_new = o_g * jnp.tanh(c_new)
        # tanh is monotonic: max_t tanh(h_t) == tanh(max_t h_t), so the
        # pooling tanh is hoisted out of the loop entirely.
        m_new = jnp.maximum(m, h_new)
        return h_new, c_new, m_new

    h0 = jnp.zeros((BP, HP), jnp.float32)
    c0 = jnp.zeros((BP, HP), jnp.float32)
    m0 = jnp.full((BP, HP), -jnp.inf, jnp.float32)   # safe since T >= 1
    _, _, m = lax.fori_loop(0, T, step, (h0, c0, m0), unroll=True)

    # ---- Phase 3: head (tanh(tanh(max)) -> linear -> softmax) -------------
    r = jnp.tanh(jnp.tanh(m))                        # R_out, (BP, HP)
    rout_ref[...] = r
    # dropout is identity in eval mode
    logit = (jnp.dot(r, wout_ref[...], preferred_element_type=jnp.float32)
             + bout_ref[...])                        # (BP, LP)
    lane = lax.broadcasted_iota(jnp.int32, logit.shape, 1)
    logit = jnp.where(lane < num_labels, logit, -jnp.inf)   # mask label padding
    mx = jnp.max(logit, axis=-1, keepdims=True)
    e = jnp.exp(logit - mx)                          # padded lanes -> exactly 0
    out_ref[...] = e / jnp.sum(e, axis=-1, keepdims=True)   # exact softmax


def lstm_forward(x, w_ih, w_hh, b_ih, b_hh, w_out, b_out):
    """x: (T, B, E) float32. Returns (out (B, L), R_out (B, H))."""
    T, B, E = x.shape
    H = w_ih.shape[0] // 4
    L = w_out.shape[0]

    # One-time host-side padding to TPU-native tiles:
    #   batch -> 8 (full sublane tile: per-step gate reads are unmasked)
    #   E/H/L -> 128 (full lane tile: gate slices and output stores are
    #                 vreg-aligned / lane-dense)
    BP = _round_up(max(B, 8), 8)
    EP = _round_up(E, 128)
    HP = _round_up(H, 128)
    LP = _round_up(L, 128)

    x_p = jnp.zeros((T, BP, EP), jnp.float32).at[:, :B, :E].set(
        jnp.asarray(x, jnp.float32))
    x2d = x_p.reshape(T * BP, EP)        # f32; cast to bf16 inside the kernel

    # Gate-blocked, lane-padded weights: gate g lives in columns
    # [g*HP, g*HP + H), so in-kernel gate slices are 128-lane aligned.
    wih_t = jnp.asarray(w_ih, jnp.float32).T        # (E, 4H)
    whh_t = jnp.asarray(w_hh, jnp.float32).T        # (H, 4H)
    bias = jnp.asarray(b_ih + b_hh, jnp.float32)    # (4H,)

    wih_p = jnp.zeros((EP, 4 * HP), jnp.float32)
    whh_p = jnp.zeros((HP, 4 * HP), jnp.float32)
    b_p = jnp.zeros((1, 4 * HP), jnp.float32)
    for g in range(4):
        wih_p = wih_p.at[:E, g * HP:g * HP + H].set(wih_t[:, g * H:(g + 1) * H])
        whh_p = whh_p.at[:H, g * HP:g * HP + H].set(whh_t[:, g * H:(g + 1) * H])
        b_p = b_p.at[0, g * HP:g * HP + H].set(bias[g * H:(g + 1) * H])
    wih_bf = wih_p.astype(jnp.bfloat16)  # one-shot input projection runs bf16
    # whh_p stays f32: keeps the recurrent c/h state accurate over long T.

    wout_p = jnp.zeros((HP, LP), jnp.float32).at[:H, :L].set(
        jnp.asarray(w_out, jnp.float32).T)
    bout_p = jnp.zeros((1, LP), jnp.float32).at[0, :L].set(
        jnp.asarray(b_out, jnp.float32))

    kernel = functools.partial(lstm_kernel, seq_len=T, bp=BP, hp=HP,
                               num_labels=L)

    out_p, rout_p = pl.pallas_call(
        kernel,
        out_shape=(jax.ShapeDtypeStruct((BP, LP), jnp.float32),
                   jax.ShapeDtypeStruct((BP, HP), jnp.float32)),
        in_specs=[pl.BlockSpec(memory_space=pltpu.MemorySpace.VMEM)
                  for _ in range(6)],
        out_specs=(pl.BlockSpec(memory_space=pltpu.MemorySpace.VMEM),
                   pl.BlockSpec(memory_space=pltpu.MemorySpace.VMEM)),
        # All T steps of f32 gate pre-activations (tiny at these shapes).
        # TODO(synk): chunk over time + double-buffer for production T*B so
        # two chunks stay under ~24-32 MiB on v7x's 64 MiB VMEM.
        scratch_shapes=[pltpu.VMEM((T * BP, 4 * HP), jnp.float32)],
    )(x2d, wih_bf, whh_p, b_p, wout_p, bout_p)

    # Un-pad: lane-dense kernel outputs sliced back to logical shapes.
    return out_p[:B, :L], rout_p[:B, :H]


def lstm_forward_ref(x, w_ih, w_hh, b_ih, b_hh, w_out, b_out):
    """Pure-JAX f32 reference matching the PyTorch forward."""
    T, B, E = x.shape
    H = w_hh.shape[1]

    def step(carry, x_t):
        h, c = carry
        gates = x_t @ w_ih.T + h @ w_hh.T + b_ih + b_hh
        i, f, g, o = jnp.split(gates, 4, axis=-1)
        i, f, o = jax.nn.sigmoid(i), jax.nn.sigmoid(f), jax.nn.sigmoid(o)
        g = jnp.tanh(g)
        c = f * c + i * g
        h = o * jnp.tanh(c)
        return (h, c), h

    h0 = jnp.zeros((B, H), jnp.float32)
    c0 = jnp.zeros((B, H), jnp.float32)
    _, hs = jax.lax.scan(step, (h0, c0), x)            # (T, B, H)
    pooled = jnp.max(jnp.tanh(hs), axis=0)             # (B, H)
    r_out = jnp.tanh(pooled)
    logit = r_out @ w_out.T + b_out
    return jax.nn.softmax(logit, axis=1), r_out


if __name__ == "__main__":
    # small shapes consistent with the module's forward
    T, B, E, H, L = 8, 2, 32, 32, 4

    key = jax.random.PRNGKey(0)
    ks = jax.random.split(key, 8)
    x = jax.random.normal(ks[0], (T, B, E), jnp.float32)

    # deterministic synthetic parameters (shapes match nn.LSTM / nn.Linear)
    w_ih = jax.random.normal(ks[1], (4 * H, E), jnp.float32) * 0.1   # weight_ih_l0
    w_hh = jax.random.normal(ks[2], (4 * H, H), jnp.float32) * 0.1   # weight_hh_l0
    b_ih = jax.random.normal(ks[3], (4 * H,), jnp.float32) * 0.1
    b_hh = jax.random.normal(ks[4], (4 * H,), jnp.float32) * 0.1
    w_out = jax.random.normal(ks[5], (L, H), jnp.float32) * 0.1      # hidden2label
    b_out = jax.random.normal(ks[6], (L,), jnp.float32) * 0.1

    out, r_out = lstm_forward(x, w_ih, w_hh, b_ih, b_hh, w_out, b_out)
    jax.block_until_ready((out, r_out))

    out_ref, r_ref = lstm_forward_ref(x, w_ih, w_hh, b_ih, b_hh, w_out, b_out)
    # Only the input projection uses bf16 operands (f32 accumulate); the
    # recurrence and head are f32, so the match is tight.
    assert jnp.allclose(out, out_ref, atol=2e-2, rtol=2e-2), \
        f"softmax mismatch: {jnp.max(jnp.abs(out - out_ref))}"
    assert jnp.allclose(r_out, r_ref, atol=2e-2, rtol=2e-2), \
        f"R_out mismatch: {jnp.max(jnp.abs(r_out - r_ref))}"

    # TODO(synk): nn.Embedding / GloveTokenizer / word2vec loading are data
    # plumbing outside forward(x) and are intentionally not reproduced.
    print("KERNEL_OK")
</pallas_src>

<mosaic_0001>
module attributes {stable_mosaic.version = 11 : i64} {
  func.func @lstm_kernel(%arg0: memref<64x128xf32, #tpu.memory_space<vmem>>, %arg1: memref<128x512xbf16, #tpu.memory_space<vmem>>, %arg2: memref<128x512xf32, #tpu.memory_space<vmem>>, %arg3: memref<1x512xf32, #tpu.memory_space<vmem>>, %arg4: memref<128x128xf32, #tpu.memory_space<vmem>>, %arg5: memref<1x128xf32, #tpu.memory_space<vmem>>, %arg6: memref<8x128xf32, #tpu.memory_space<vmem>>, %arg7: memref<8x128xf32, #tpu.memory_space<vmem>>, %arg8: memref<64x512xf32, #tpu.memory_space<vmem>>) attributes {dimension_semantics = [], scalar_prefetch = 0 : i64, scratch_operands = 1 : i64, tpu.core_type = #tpu.core_type<tc>} {
    %c0 = arith.constant 0 : index
    %c0_0 = arith.constant 0 : index
    %0 = vector.load %arg0[%c0, %c0_0] : memref<64x128xf32, #tpu.memory_space<vmem>>, vector<64x128xf32>
    %1 = arith.truncf %0 : vector<64x128xf32> to vector<64x128xbf16>
    %c0_1 = arith.constant 0 : index
    %c0_2 = arith.constant 0 : index
    %2 = vector.load %arg1[%c0_1, %c0_2] : memref<128x512xbf16, #tpu.memory_space<vmem>>, vector<128x512xbf16>
    %cst = arith.constant dense<0.000000e+00> : vector<64x512xf32>
    %3 = tpu.matmul %1, %2, %cst {dimension_numbers = #tpu.dot_dimension_numbers<[1], [0], [0], [1], [0, 0, 1, 1], [], []>} : vector<64x128xbf16>, vector<128x512xbf16>, vector<64x512xf32> -> vector<64x512xf32>
    %c0_3 = arith.constant 0 : index
    %c0_4 = arith.constant 0 : index
    %4 = vector.load %arg3[%c0_3, %c0_4] : memref<1x512xf32, #tpu.memory_space<vmem>>, vector<1x512xf32>
    %5 = vector.broadcast %4 : vector<1x512xf32> to vector<64x512xf32>
    %6 = arith.addf %3, %5 : vector<64x512xf32>
    %c0_5 = arith.constant 0 : index
    %c0_6 = arith.constant 0 : index
    %7 = vector.load %arg8[%c0_5, %c0_6] : memref<64x512xf32, #tpu.memory_space<vmem>>, vector<64x512xf32>
    tpu.vector_store %arg8[%c0_5, %c0_6], %6 {strides = array<i32>} : memref<64x512xf32, #tpu.memory_space<vmem>>, vector<64x512xf32>,
    %c0_7 = arith.constant 0 : index
    %c0_8 = arith.constant 0 : index
    %8 = vector.load %arg2[%c0_7, %c0_8] : memref<128x512xf32, #tpu.memory_space<vmem>>, vector<128x512xf32>
    %cst_9 = arith.constant 0.000000e+00 : f32
    %9 = vector.broadcast %cst_9 : f32 to vector<8x128xf32>
    %cst_10 = arith.constant 0.000000e+00 : f32
    %10 = vector.broadcast %cst_10 : f32 to vector<8x128xf32>
    %cst_11 = arith.constant 0xFF800000 : f32
    %11 = vector.broadcast %cst_11 : f32 to vector<8x128xf32>
    %c0_i32 = arith.constant 0 : i32
    %c8_i32 = arith.constant 8 : i32
    %12 = arith.muli %c0_i32, %c8_i32 : i32
    %13 = tpu.assume_multiple %12, 8 : i32
    %14 = arith.index_cast %13 : i32 to index
    %c0_12 = arith.constant 0 : index
    %15 = vector.load %arg8[%14, %c0_12] : memref<64x512xf32, #tpu.memory_space<vmem>>, vector<8x512xf32>
    %cst_13 = arith.constant dense<0.000000e+00> : vector<8x512xf32>
    %16 = tpu.matmul %9, %8, %cst_13 {dimension_numbers = #tpu.dot_dimension_numbers<[1], [0], [0], [1], [0, 0, 1, 1], [], []>} : vector<8x128xf32>, vector<128x512xf32>, vector<8x512xf32> -> vector<8x512xf32>
    %17 = arith.addf %15, %16 : vector<8x512xf32>
    %18 = vector.extract_strided_slice %17 {offsets = [0, 0], sizes = [8, 128], strides = [1, 1]} : vector<8x512xf32> to vector<8x128xf32>
    %19 = arith.negf %18 : vector<8x128xf32>
    %20 = math.exp %19 : vector<8x128xf32>
    %cst_14 = arith.constant 1.000000e+00 : f32
    %21 = vector.broadcast %cst_14 : f32 to vector<8x128xf32>
    %22 = arith.addf %21, %20 : vector<8x128xf32>
    %23 = arith.divf %21, %22 : vector<8x128xf32>
    %24 = vector.extract_strided_slice %17 {offsets = [0, 128], sizes = [8, 128], strides = [1, 1]} : vector<8x512xf32> to vector<8x128xf32>
    %25 = arith.negf %24 : vector<8x128xf32>
    %26 = math.exp %25 : vector<8x128xf32>
    %cst_15 = arith.constant 1.000000e+00 : f32
    %27 = vector.broadcast %cst_15 : f32 to vector<8x128xf32>
    %28 = arith.addf %27, %26 : vector<8x128xf32>
    %29 = arith.divf %27, %28 : vector<8x128xf32>
    %30 = vector.extract_strided_slice %17 {offsets = [0, 256], sizes = [8, 128], strides = [1, 1]} : vector<8x512xf32> to vector<8x128xf32>
    %31 = math.tanh %30 : vector<8x128xf32>
    %32 = vector.extract_strided_slice %17 {offsets = [0, 384], sizes = [8, 128], strides = [1, 1]} : vector<8x512xf32> to vector<8x128xf32>
    %33 = arith.negf %32 : vector<8x128xf32>
    %34 = math.exp %33 : vector<8x128xf32>
    %cst_16 = arith.constant 1.000000e+00 : f32
    %35 = vector.broadcast %cst_16 : f32 to vector<8x128xf32>
    %36 = arith.addf %35, %34 : vector<8x128xf32>
    %37 = arith.divf %35, %36 : vector<8x128xf32>
    %38 = arith.mulf %29, %10 : vector<8x128xf32>
    %39 = arith.mulf %23, %31 : vector<8x128xf32>
    %40 = arith.addf %38, %39 : vector<8x128xf32>
    %41 = math.tanh %40 : vector<8x128xf32>
    %42 = arith.mulf %37, %41 : vector<8x128xf32>
    %43 = arith.maximumf %11, %42 : vector<8x128xf32>
    %c1_i32 = arith.constant 1 : i32
    %c8_i32_17 = arith.constant 8 : i32
    %44 = arith.muli %c1_i32, %c8_i32_17 : i32
    %45 = tpu.assume_multiple %44, 8 : i32
    %46 = arith.index_cast %45 : i32 to index
    %c0_18 = arith.constant 0 : index
    %47 = vector.load %arg8[%46, %c0_18] : memref<64x512xf32, #tpu.memory_space<vmem>>, vector<8x512xf32>
    %cst_19 = arith.constant dense<0.000000e+00> : vector<8x512xf32>
    %48 = tpu.matmul %42, %8, %cst_19 {dimension_numbers = #tpu.dot_dimension_numbers<[1], [0], [0], [1], [0, 0, 1, 1], [], []>} : vector<8x128xf32>, vector<128x512xf32>, vector<8x512xf32> -> vector<8x512xf32>
    %49 = arith.addf %47, %48 : vector<8x512xf32>
    %50 = vector.extract_strided_slice %49 {offsets = [0, 0], sizes = [8, 128], strides = [1, 1]} : vector<8x512xf32> to vector<8x128xf32>
    %51 = arith.negf %50 : vector<8x128xf32>
    %52 = math.exp %51 : vector<8x128xf32>
    %cst_20 = arith.constant 1.000000e+00 : f32
    %53 = vector.broadcast %cst_20 : f32 to vector<8x128xf32>
    %54 = arith.addf %53, %52 : vector<8x128xf32>
    %55 = arith.divf %53, %54 : vector<8x128xf32>
    %56 = vector.extract_strided_slice %49 {offsets = [0, 128], sizes = [8, 128], strides = [1, 1]} : vector<8x512xf32> to vector<8x128xf32>
    %57 = arith.negf %56 : vector<8x128xf32>
    %58 = math.exp %57 : vector<8x128xf32>
    %cst_21 = arith.constant 1.000000e+00 : f32
    %59 = vector.broadcast %cst_21 : f32 to vector<8x128xf32>
    %60 = arith.addf %59, %58 : vector<8x128xf32>
    %61 = arith.divf %59, %60 : vector<8x128xf32>
    %62 = vector.extract_strided_slice %49 {offsets = [0, 256], sizes = [8, 128], strides = [1, 1]} : vector<8x512xf32> to vector<8x128xf32>
    %63 = math.tanh %62 : vector<8x128xf32>
    %64 = vector.extract_strided_slice %49 {offsets = [0, 384], sizes = [8, 128], strides = [1, 1]} : vector<8x512xf32> to vector<8x128xf32>
    %65 = arith.negf %64 : vector<8x128xf32>
    %66 = math.exp %65 : vector<8x128xf32>
    %cst_22 = arith.constant 1.000000e+00 : f32
    %67 = vector.broadcast %cst_22 : f32 to vector<8x128xf32>
    %68 = arith.addf %67, %66 : vector<8x128xf32>
    %69 = arith.divf %67, %68 : vector<8x128xf32>
    %70 = arith.mulf %61, %40 : vector<8x128xf32>
    %71 = arith.mulf %55, %63 : vector<8x128xf32>
    %72 = arith.addf %70, %71 : vector<8x128xf32>
    %73 = math.tanh %72 : vector<8x128xf32>
    %74 = arith.mulf %69, %73 : vector<8x128xf32>
    %75 = arith.maximumf %43, %74 : vector<8x128xf32>
    %c2_i32 = arith.constant 2 : i32
    %c8_i32_23 = arith.constant 8 : i32
    %76 = arith.muli %c2_i32, %c8_i32_23 : i32
    %77 = tpu.assume_multiple %76, 8 : i32
    %78 = arith.index_cast %77 : i32 to index
    %c0_24 = arith.constant 0 : index
    %79 = vector.load %arg8[%78, %c0_24] : memref<64x512xf32, #tpu.memory_space<vmem>>, vector<8x512xf32>
    %cst_25 = arith.constant dense<0.000000e+00> : vector<8x512xf32>
    %80 = tpu.matmul %74, %8, %cst_25 {dimension_numbers = #tpu.dot_dimension_numbers<[1], [0], [0], [1], [0, 0, 1, 1], [], []>} : vector<8x128xf32>, vector<128x512xf32>, vector<8x512xf32> -> vector<8x512xf32>
    %81 = arith.addf %79, %80 : vector<8x512xf32>
    %82 = vector.extract_strided_slice %81 {offsets = [0, 0], sizes = [8, 128], strides = [1, 1]} : vector<8x512xf32> to vector<8x128xf32>
    %83 = arith.negf %82 : vector<8x128xf32>
    %84 = math.exp %83 : vector<8x128xf32>
    %cst_26 = arith.constant 1.000000e+00 : f32
    %85 = vector.broadcast %cst_26 : f32 to vector<8x128xf32>
    %86 = arith.addf %85, %84 : vector<8x128xf32>
    %87 = arith.divf %85, %86 : vector<8x128xf32>
    %88 = vector.extract_strided_slice %81 {offsets = [0, 128], sizes = [8, 128], strides = [1, 1]} : vector<8x512xf32> to vector<8x128xf32>
    %89 = arith.negf %88 : vector<8x128xf32>
    %90 = math.exp %89 : vector<8x128xf32>
    %cst_27 = arith.constant 1.000000e+00 : f32
    %91 = vector.broadcast %cst_27 : f32 to vector<8x128xf32>
    %92 = arith.addf %91, %90 : vector<8x128xf32>
    %93 = arith.divf %91, %92 : vector<8x128xf32>
    %94 = vector.extract_strided_slice %81 {offsets = [0, 256], sizes = [8, 128], strides = [1, 1]} : vector<8x512xf32> to vector<8x128xf32>
    %95 = math.tanh %94 : vector<8x128xf32>
    %96 = vector.extract_strided_slice %81 {offsets = [0, 384], sizes = [8, 128], strides = [1, 1]} : vector<8x512xf32> to vector<8x128xf32>
    %97 = arith.negf %96 : vector<8x128xf32>
    %98 = math.exp %97 : vector<8x128xf32>
    %cst_28 = arith.constant 1.000000e+00 : f32
    %99 = vector.broadcast %cst_28 : f32 to vector<8x128xf32>
    %100 = arith.addf %99, %98 : vector<8x128xf32>
    %101 = arith.divf %99, %100 : vector<8x128xf32>
    %102 = arith.mulf %93, %72 : vector<8x128xf32>
    %103 = arith.mulf %87, %95 : vector<8x128xf32>
    %104 = arith.addf %102, %103 : vector<8x128xf32>
    %105 = math.tanh %104 : vector<8x128xf32>
    %106 = arith.mulf %101, %105 : vector<8x128xf32>
    %107 = arith.maximumf %75, %106 : vector<8x128xf32>
    %c3_i32 = arith.constant 3 : i32
    %c8_i32_29 = arith.constant 8 : i32
    %108 = arith.muli %c3_i32, %c8_i32_29 : i32
    %109 = tpu.assume_multiple %108, 8 : i32
    %110 = arith.index_cast %109 : i32 to index
    %c0_30 = arith.constant 0 : index
    %111 = vector.load %arg8[%110, %c0_30] : memref<64x512xf32, #tpu.memory_space<vmem>>, vector<8x512xf32>
    %cst_31 = arith.constant dense<0.000000e+00> : vector<8x512xf32>
    %112 = tpu.matmul %106, %8, %cst_31 {dimension_numbers = #tpu.dot_dimension_numbers<[1], [0], [0], [1], [0, 0, 1, 1], [], []>} : vector<8x128xf32>, vector<128x512xf32>, vector<8x512xf32> -> vector<8x512xf32>
    %113 = arith.addf %111, %112 : vector<8x512xf32>
    %114 = vector.extract_strided_slice %113 {offsets = [0, 0], sizes = [8, 128], strides = [1, 1]} : vector<8x512xf32> to vector<8x128xf32>
    %115 = arith.negf %114 : vector<8x128xf32>
    %116 = math.exp %115 : vector<8x128xf32>
    %cst_32 = arith.constant 1.000000e+00 : f32
    %117 = vector.broadcast %cst_32 : f32 to vector<8x128xf32>
    %118 = arith.addf %117, %116 : vector<8x128xf32>
    %119 = arith.divf %117, %118 : vector<8x128xf32>
    %120 = vector.extract_strided_slice %113 {offsets = [0, 128], sizes = [8, 128], strides = [1, 1]} : vector<8x512xf32> to vector<8x128xf32>
    %121 = arith.negf %120 : vector<8x128xf32>
    %122 = math.exp %121 : vector<8x128xf32>
    %cst_33 = arith.constant 1.000000e+00 : f32
    %123 = vector.broadcast %cst_33 : f32 to vector<8x128xf32>
    %124 = arith.addf %123, %122 : vector<8x128xf32>
    %125 = arith.divf %123, %124 : vector<8x128xf32>
    %126 = vector.extract_strided_slice %113 {offsets = [0, 256], sizes = [8, 128], strides = [1, 1]} : vector<8x512xf32> to vector<8x128xf32>
    %127 = math.tanh %126 : vector<8x128xf32>
    %128 = vector.extract_strided_slice %113 {offsets = [0, 384], sizes = [8, 128], strides = [1, 1]} : vector<8x512xf32> to vector<8x128xf32>
    %129 = arith.negf %128 : vector<8x128xf32>
    %130 = math.exp %129 : vector<8x128xf32>
    %cst_34 = arith.constant 1.000000e+00 : f32
    %131 = vector.broadcast %cst_34 : f32 to vector<8x128xf32>
    %132 = arith.addf %131, %130 : vector<8x128xf32>
    %133 = arith.divf %131, %132 : vector<8x128xf32>
    %134 = arith.mulf %125, %104 : vector<8x128xf32>
    %135 = arith.mulf %119, %127 : vector<8x128xf32>
    %136 = arith.addf %134, %135 : vector<8x128xf32>
    %137 = math.tanh %136 : vector<8x128xf32>
    %138 = arith.mulf %133, %137 : vector<8x128xf32>
    %139 = arith.maximumf %107, %138 : vector<8x128xf32>
    %c4_i32 = arith.constant 4 : i32
    %c8_i32_35 = arith.constant 8 : i32
    %140 = arith.muli %c4_i32, %c8_i32_35 : i32
    %141 = tpu.assume_multiple %140, 8 : i32
    %142 = arith.index_cast %141 : i32 to index
    %c0_36 = arith.constant 0 : index
    %143 = vector.load %arg8[%142, %c0_36] : memref<64x512xf32, #tpu.memory_space<vmem>>, vector<8x512xf32>
    %cst_37 = arith.constant dense<0.000000e+00> : vector<8x512xf32>
    %144 = tpu.matmul %138, %8, %cst_37 {dimension_numbers = #tpu.dot_dimension_numbers<[1], [0], [0], [1], [0, 0, 1, 1], [], []>} : vector<8x128xf32>, vector<128x512xf32>, vector<8x512xf32> -> vector<8x512xf32>
    %145 = arith.addf %143, %144 : vector<8x512xf32>
    %146 = vector.extract_strided_slice %145 {offsets = [0, 0], sizes = [8, 128], strides = [1, 1]} : vector<8x512xf32> to vector<8x128xf32>
    %147 = arith.negf %146 : vector<8x128xf32>
    %148 = math.exp %147 : vector<8x128xf32>
    %cst_38 = arith.constant 1.000000e+00 : f32
    %149 = vector.broadcast %cst_38 : f32 to vector<8x128xf32>
    %150 = arith.addf %149, %148 : vector<8x128xf32>
    %151 = arith.divf %149, %150 : vector<8x128xf32>
    %152 = vector.extract_strided_slice %145 {offsets = [0, 128], sizes = [8, 128], strides = [1, 1]} : vector<8x512xf32> to vector<8x128xf32>
    %153 = arith.negf %152 : vector<8x128xf32>
    %154 = math.exp %153 : vector<8x128xf32>
    %cst_39 = arith.constant 1.000000e+00 : f32
    %155 = vector.broadcast %cst_39 : f32 to vector<8x128xf32>
    %156 = arith.addf %155, %154 : vector<8x128xf32>
    %157 = arith.divf %155, %156 : vector<8x128xf32>
    %158 = vector.extract_strided_slice %145 {offsets = [0, 256], sizes = [8, 128], strides = [1, 1]} : vector<8x512xf32> to vector<8x128xf32>
    %159 = math.tanh %158 : vector<8x128xf32>
    %160 = vector.extract_strided_slice %145 {offsets = [0, 384], sizes = [8, 128], strides = [1, 1]} : vector<8x512xf32> to vector<8x128xf32>
    %161 = arith.negf %160 : vector<8x128xf32>
    %162 = math.exp %161 : vector<8x128xf32>
    %cst_40 = arith.constant 1.000000e+00 : f32
    %163 = vector.broadcast %cst_40 : f32 to vector<8x128xf32>
    %164 = arith.addf %163, %162 : vector<8x128xf32>
    %165 = arith.divf %163, %164 : vector<8x128xf32>
    %166 = arith.mulf %157, %136 : vector<8x128xf32>
    %167 = arith.mulf %151, %159 : vector<8x128xf32>
    %168 = arith.addf %166, %167 : vector<8x128xf32>
    %169 = math.tanh %168 : vector<8x128xf32>
    %170 = arith.mulf %165, %169 : vector<8x128xf32>
    %171 = arith.maximumf %139, %170 : vector<8x128xf32>
    %c5_i32 = arith.constant 5 : i32
    %c8_i32_41 = arith.constant 8 : i32
    %172 = arith.muli %c5_i32, %c8_i32_41 : i32
    %173 = tpu.assume_multiple %172, 8 : i32
    %174 = arith.index_cast %173 : i32 to index
    %c0_42 = arith.constant 0 : index
    %175 = vector.load %arg8[%174, %c0_42] : memref<64x512xf32, #tpu.memory_space<vmem>>, vector<8x512xf32>
    %cst_43 = arith.constant dense<0.000000e+00> : vector<8x512xf32>
    %176 = tpu.matmul %170, %8, %cst_43 {dimension_numbers = #tpu.dot_dimension_numbers<[1], [0], [0], [1], [0, 0, 1, 1], [], []>} : vector<8x128xf32>, vector<128x512xf32>, vector<8x512xf32> -> vector<8x512xf32>
    %177 = arith.addf %175, %176 : vector<8x512xf32>
    %178 = vector.extract_strided_slice %177 {offsets = [0, 0], sizes = [8, 128], strides = [1, 1]} : vector<8x512xf32> to vector<8x128xf32>
    %179 = arith.negf %178 : vector<8x128xf32>
    %180 = math.exp %179 : vector<8x128xf32>
    %cst_44 = arith.constant 1.000000e+00 : f32
    %181 = vector.broadcast %cst_44 : f32 to vector<8x128xf32>
    %182 = arith.addf %181, %180 : vector<8x128xf32>
    %183 = arith.divf %181, %182 : vector<8x128xf32>
    %184 = vector.extract_strided_slice %177 {offsets = [0, 128], sizes = [8, 128], strides = [1, 1]} : vector<8x512xf32> to vector<8x128xf32>
    %185 = arith.negf %184 : vector<8x128xf32>
    %186 = math.exp %185 : vector<8x128xf32>
    %cst_45 = arith.constant 1.000000e+00 : f32
    %187 = vector.broadcast %cst_45 : f32 to vector<8x128xf32>
    %188 = arith.addf %187, %186 : vector<8x128xf32>
    %189 = arith.divf %187, %188 : vector<8x128xf32>
    %190 = vector.extract_strided_slice %177 {offsets = [0, 256], sizes = [8, 128], strides = [1, 1]} : vector<8x512xf32> to vector<8x128xf32>
    %191 = math.tanh %190 : vector<8x128xf32>
    %192 = vector.extract_strided_slice %177 {offsets = [0, 384], sizes = [8, 128], strides = [1, 1]} : vector<8x512xf32> to vector<8x128xf32>
    %193 = arith.negf %192 : vector<8x128xf32>
    %194 = math.exp %193 : vector<8x128xf32>
    %cst_46 = arith.constant 1.000000e+00 : f32
    %195 = vector.broadcast %cst_46 : f32 to vector<8x128xf32>
    %196 = arith.addf %195, %194 : vector<8x128xf32>
    %197 = arith.divf %195, %196 : vector<8x128xf32>
    %198 = arith.mulf %189, %168 : vector<8x128xf32>
    %199 = arith.mulf %183, %191 : vector<8x128xf32>
    %200 = arith.addf %198, %199 : vector<8x128xf32>
    %201 = math.tanh %200 : vector<8x128xf32>
    %202 = arith.mulf %197, %201 : vector<8x128xf32>
    %203 = arith.maximumf %171, %202 : vector<8x128xf32>
    %c6_i32 = arith.constant 6 : i32
    %c8_i32_47 = arith.constant 8 : i32
    %204 = arith.muli %c6_i32, %c8_i32_47 : i32
    %205 = tpu.assume_multiple %204, 8 : i32
    %206 = arith.index_cast %205 : i32 to index
    %c0_48 = arith.constant 0 : index
    %207 = vector.load %arg8[%206, %c0_48] : memref<64x512xf32, #tpu.memory_space<vmem>>, vector<8x512xf32>
    %cst_49 = arith.constant dense<0.000000e+00> : vector<8x512xf32>
    %208 = tpu.matmul %202, %8, %cst_49 {dimension_numbers = #tpu.dot_dimension_numbers<[1], [0], [0], [1], [0, 0, 1, 1], [], []>} : vector<8x128xf32>, vector<128x512xf32>, vector<8x512xf32> -> vector<8x512xf32>
    %209 = arith.addf %207, %208 : vector<8x512xf32>
    %210 = vector.extract_strided_slice %209 {offsets = [0, 0], sizes = [8, 128], strides = [1, 1]} : vector<8x512xf32> to vector<8x128xf32>
    %211 = arith.negf %210 : vector<8x128xf32>
    %212 = math.exp %211 : vector<8x128xf32>
    %cst_50 = arith.constant 1.000000e+00 : f32
    %213 = vector.broadcast %cst_50 : f32 to vector<8x128xf32>
    %214 = arith.addf %213, %212 : vector<8x128xf32>
    %215 = arith.divf %213, %214 : vector<8x128xf32>
    %216 = vector.extract_strided_slice %209 {offsets = [0, 128], sizes = [8, 128], strides = [1, 1]} : vector<8x512xf32> to vector<8x128xf32>
    %217 = arith.negf %216 : vector<8x128xf32>
    %218 = math.exp %217 : vector<8x128xf32>
    %cst_51 = arith.constant 1.000000e+00 : f32
    %219 = vector.broadcast %cst_51 : f32 to vector<8x128xf32>
    %220 = arith.addf %219, %218 : vector<8x128xf32>
    %221 = arith.divf %219, %220 : vector<8x128xf32>
    %222 = vector.extract_strided_slice %209 {offsets = [0, 256], sizes = [8, 128], strides = [1, 1]} : vector<8x512xf32> to vector<8x128xf32>
    %223 = math.tanh %222 : vector<8x128xf32>
    %224 = vector.extract_strided_slice %209 {offsets = [0, 384], sizes = [8, 128], strides = [1, 1]} : vector<8x512xf32> to vector<8x128xf32>
    %225 = arith.negf %224 : vector<8x128xf32>
    %226 = math.exp %225 : vector<8x128xf32>
    %cst_52 = arith.constant 1.000000e+00 : f32
    %227 = vector.broadcast %cst_52 : f32 to vector<8x128xf32>
    %228 = arith.addf %227, %226 : vector<8x128xf32>
    %229 = arith.divf %227, %228 : vector<8x128xf32>
    %230 = arith.mulf %221, %200 : vector<8x128xf32>
    %231 = arith.mulf %215, %223 : vector<8x128xf32>
    %232 = arith.addf %230, %231 : vector<8x128xf32>
    %233 = math.tanh %232 : vector<8x128xf32>
    %234 = arith.mulf %229, %233 : vector<8x128xf32>
    %235 = arith.maximumf %203, %234 : vector<8x128xf32>
    %c7_i32 = arith.constant 7 : i32
    %c8_i32_53 = arith.constant 8 : i32
    %236 = arith.muli %c7_i32, %c8_i32_53 : i32
    %237 = tpu.assume_multiple %236, 8 : i32
    %238 = arith.index_cast %237 : i32 to index
    %c0_54 = arith.constant 0 : index
    %239 = vector.load %arg8[%238, %c0_54] : memref<64x512xf32, #tpu.memory_space<vmem>>, vector<8x512xf32>
    %cst_55 = arith.constant dense<0.000000e+00> : vector<8x512xf32>
    %240 = tpu.matmul %234, %8, %cst_55 {dimension_numbers = #tpu.dot_dimension_numbers<[1], [0], [0], [1], [0, 0, 1, 1], [], []>} : vector<8x128xf32>, vector<128x512xf32>, vector<8x512xf32> -> vector<8x512xf32>
    %241 = arith.addf %239, %240 : vector<8x512xf32>
    %242 = vector.extract_strided_slice %241 {offsets = [0, 0], sizes = [8, 128], strides = [1, 1]} : vector<8x512xf32> to vector<8x128xf32>
    %243 = arith.negf %242 : vector<8x128xf32>
    %244 = math.exp %243 : vector<8x128xf32>
    %cst_56 = arith.constant 1.000000e+00 : f32
    %245 = vector.broadcast %cst_56 : f32 to vector<8x128xf32>
    %246 = arith.addf %245, %244 : vector<8x128xf32>
    %247 = arith.divf %245, %246 : vector<8x128xf32>
    %248 = vector.extract_strided_slice %241 {offsets = [0, 128], sizes = [8, 128], strides = [1, 1]} : vector<8x512xf32> to vector<8x128xf32>
    %249 = arith.negf %248 : vector<8x128xf32>
    %250 = math.exp %249 : vector<8x128xf32>
    %cst_57 = arith.constant 1.000000e+00 : f32
    %251 = vector.broadcast %cst_57 : f32 to vector<8x128xf32>
    %252 = arith.addf %251, %250 : vector<8x128xf32>
    %253 = arith.divf %251, %252 : vector<8x128xf32>
    %254 = vector.extract_strided_slice %241 {offsets = [0, 256], sizes = [8, 128], strides = [1, 1]} : vector<8x512xf32> to vector<8x128xf32>
    %255 = math.tanh %254 : vector<8x128xf32>
    %256 = vector.extract_strided_slice %241 {offsets = [0, 384], sizes = [8, 128], strides = [1, 1]} : vector<8x512xf32> to vector<8x128xf32>
    %257 = arith.negf %256 : vector<8x128xf32>
    %258 = math.exp %257 : vector<8x128xf32>
    %cst_58 = arith.constant 1.000000e+00 : f32
    %259 = vector.broadcast %cst_58 : f32 to vector<8x128xf32>
    %260 = arith.addf %259, %258 : vector<8x128xf32>
    %261 = arith.divf %259, %260 : vector<8x128xf32>
    %262 = arith.mulf %253, %232 : vector<8x128xf32>
    %263 = arith.mulf %247, %255 : vector<8x128xf32>
    %264 = arith.addf %262, %263 : vector<8x128xf32>
    %265 = math.tanh %264 : vector<8x128xf32>
    %266 = arith.mulf %261, %265 : vector<8x128xf32>
    %267 = arith.maximumf %235, %266 : vector<8x128xf32>
    %c8_i32_59 = arith.constant 8 : i32
    %268 = math.tanh %267 : vector<8x128xf32>
    %269 = math.tanh %268 : vector<8x128xf32>
    %c0_60 = arith.constant 0 : index
    %c0_61 = arith.constant 0 : index
    %270 = vector.load %arg7[%c0_60, %c0_61] : memref<8x128xf32, #tpu.memory_space<vmem>>, vector<8x128xf32>
    tpu.vector_store %arg7[%c0_60, %c0_61], %269 {strides = array<i32>} : memref<8x128xf32, #tpu.memory_space<vmem>>, vector<8x128xf32>,
    %c0_62 = arith.constant 0 : index
    %c0_63 = arith.constant 0 : index
    %271 = vector.load %arg4[%c0_62, %c0_63] : memref<128x128xf32, #tpu.memory_space<vmem>>, vector<128x128xf32>
    %cst_64 = arith.constant dense<0.000000e+00> : vector<8x128xf32>
    %272 = tpu.matmul %269, %271, %cst_64 {dimension_numbers = #tpu.dot_dimension_numbers<[1], [0], [0], [1], [0, 0, 1, 1], [], []>} : vector<8x128xf32>, vector<128x128xf32>, vector<8x128xf32> -> vector<8x128xf32>
    %c0_65 = arith.constant 0 : index
    %c0_66 = arith.constant 0 : index
    %273 = vector.load %arg5[%c0_65, %c0_66] : memref<1x128xf32, #tpu.memory_space<vmem>>, vector<1x128xf32>
    %274 = vector.broadcast %273 : vector<1x128xf32> to vector<8x128xf32>
    %275 = arith.addf %272, %274 : vector<8x128xf32>
    %276 = tpu.iota {dimensions = array<i32: 1>} : vector<8x128xi32>
    %c4_i32_67 = arith.constant 4 : i32
    %277 = vector.broadcast %c4_i32_67 : i32 to vector<8x128xi32>
    %278 = arith.cmpi slt, %276, %277 : vector<8x128xi32>
    %cst_68 = arith.constant 0xFF800000 : f32
    %279 = vector.broadcast %cst_68 : f32 to vector<8x128xf32>
    %280 = arith.select %278, %275, %279 : vector<8x128xi1>, vector<8x128xf32>
    %cst_69 = arith.constant dense<0xFF800000> : vector<8xf32>
    %281 = vector.multi_reduction <maximumf>, %280, %cst_69 [1] : vector<8x128xf32> to vector<8xf32>
    %282 = vector.shape_cast %281 : vector<8xf32> to vector<8x1xf32>
    %283 = vector.broadcast %282 : vector<8x1xf32> to vector<8x128xf32>
    %284 = arith.subf %280, %283 : vector<8x128xf32>
    %285 = math.exp %284 : vector<8x128xf32>
    %cst_70 = arith.constant dense<0.000000e+00> : vector<8xf32>
    %286 = vector.multi_reduction <add>, %285, %cst_70 [1] : vector<8x128xf32> to vector<8xf32>
    %287 = vector.shape_cast %286 : vector<8xf32> to vector<8x1xf32>
    %288 = vector.broadcast %287 : vector<8x1xf32> to vector<8x128xf32>
    %289 = arith.divf %285, %288 : vector<8x128xf32>
    %c0_71 = arith.constant 0 : index
    %c0_72 = arith.constant 0 : index
    %290 = vector.load %arg6[%c0_71, %c0_72] : memref<8x128xf32, #tpu.memory_space<vmem>>, vector<8x128xf32>
    tpu.vector_store %arg6[%c0_71, %c0_72], %289 {strides = array<i32>} : memref<8x128xf32, #tpu.memory_space<vmem>>, vector<8x128xf32>,
    return
  }
}

</mosaic_0001>

<llo_original>
// kernel: tpu_custom_call.1
$region0: #{tpu_custom_call.1}
  #allocation0 [shape = 'u32[]', space=smem, size = 0x4, offset = 0x4, fixed_abs, tag = 'smem constant byte address 0x4 - core index']
  #allocation1 [shape = 'u32[144,128]{1,0:T(1,128)}', space=vmem, size = 0x12000, scoped, tag = 'internal scratch']
  #allocation2 [shape = 'f32[64,512]{1,0:T(8,128)}', space=vmem, size = 0x20000, scoped, tag = 'scratch operand']
  %s0 = inlined_call_operand.hbm [shape: f32[64,128], index: 0, kind: input, shape index: {}]
  %s1 = inlined_call_operand.hbm [shape: bf16[128,512], index: 1, kind: input, shape index: {}]
  %s2 = inlined_call_operand.hbm [shape: f32[128,512], index: 2, kind: input, shape index: {}]
  %s3 = inlined_call_operand.vmem [shape: f32[1,512], index: 3, kind: input, shape index: {}]
  %s4 = inlined_call_operand.hbm [shape: f32[128,128], index: 4, kind: input, shape index: {}]
  %s5 = inlined_call_operand.vmem [shape: f32[1,128], index: 5, kind: input, shape index: {}]
  %s6 = inlined_call_operand.hbm [shape: f32[8,128], index: 6, kind: output, shape index: {0}]
  %s7 = inlined_call_operand.hbm [shape: f32[8,128], index: 7, kind: output, shape index: {1}]
  %8 = xla_tuple %s6, %s7
  %s9 = sld [smem:[#allocation0]]
  $region58: #{tpu_custom_call.1} parent=0
    _
  %s11 = ssub.s32 1, %s9
  %s12 = scalar_select 0, %s11, %s9
  $region1: #{tpu_custom_call.1} parent=0
    #allocation3 [shape = 'u8[32768]{0}', space=vmem, size = 0x8000, scoped, tag = 'input window, operand 0, single buffered']
    #allocation4 [shape = 's32[1]{0}', space=sflag, size = 0x4, scoped, tag = 'scoped memory for tpu_custom_call.1']
    #allocation5 [shape = 's32[1]{0}', space=sflag, size = 0x4, scoped, tag = 'scoped memory for tpu_custom_call.1']
    #allocation6 [shape = 'u8[131072]{0}', space=vmem, size = 0x20000, scoped, tag = 'input window, operand 1, single buffered']
    #allocation7 [shape = 's32[1]{0}', space=sflag, size = 0x4, scoped, tag = 'scoped memory for tpu_custom_call.1']
    #allocation8 [shape = 'u8[262144]{0}', space=vmem, size = 0x40000, scoped, tag = 'input window, operand 2, single buffered']
    #allocation9 [shape = 'u8[65536]{0}', space=vmem, size = 0x10000, scoped, tag = 'input window, operand 4, single buffered']
    #allocation10 [shape = 's32[1]{0}', space=sflag, size = 0x4, scoped, tag = 'scoped memory for tpu_custom_call.1']
    #allocation11 [shape = 'u8[4096]{0}', space=vmem, size = 0x1000, scoped, tag = 'output window, operand 0, single buffered']
    #allocation12 [shape = 'u8[4096]{0}', space=vmem, size = 0x1000, scoped, tag = 'output window, operand 1, single buffered']
    #allocation13 [shape = 's32[1]{0}', space=sflag, size = 0x4, scoped, tag = 'scoped memory for tpu_custom_call.1']
    %13 = vsyncpa [#allocation4], 0
    %14 = vsyncpa [#allocation7], 0
    %15 = vsyncpa [#allocation10], 0
    %16 = vsyncpa [#allocation5], 0
    %17 = vsyncpa [#allocation13], 0
    // Predicated region
    $region2: #{tpu_custom_call.1} parent=1 // pred_check
      _
    $region3: #{tpu_custom_call.1} parent=1 // pred_check_branch
      %19 = sbr.rel (0) target = $region5
    $region4: #{tpu_custom_call.1} parent=1 // pred_region
      %s21 = ssub.s32 1024, 1024
      %22 = vsyncadd [#allocation4], %s21
      %s23 = sshll.u32 [#allocation3], 4
      %s24 = int_to_ptr.vmem [resolvable:$true] %s23
      %29 = dma.hbm_to_vmem [thread:$0]  %s0, 1024, %s24, [#allocation4], 128, 128, 8
    $region5: #{tpu_custom_call.1} parent=1 // pred_fallthru
      _
    // Predicated region
    $region6: #{tpu_custom_call.1} parent=1 // pred_check
      _
    $region7: #{tpu_custom_call.1} parent=1 // pred_check_branch
      %31 = sbr.rel (0) target = $region9
    $region8: #{tpu_custom_call.1} parent=1 // pred_region
      %s33 = ssub.s32 4096, 4096
      %34 = vsyncadd [#allocation7], %s33
      %s35 = sshll.u32 [#allocation6], 4
      %s36 = int_to_ptr.vmem [resolvable:$true] %s35
      %41 = dma.hbm_to_vmem [thread:$0]  %s1, 4096, %s36, [#allocation7], 256, 256, 16
    $region9: #{tpu_custom_call.1} parent=1 // pred_fallthru
      _
    // Predicated region
    $region10: #{tpu_custom_call.1} parent=1 // pred_check
      _
    $region11: #{tpu_custom_call.1} parent=1 // pred_check_branch
      %43 = sbr.rel (0) target = $region13
    $region12: #{tpu_custom_call.1} parent=1 // pred_region
      %s45 = ssub.s32 8192, 8192
      %46 = vsyncadd [#allocation7], %s45
      %s47 = sshll.u32 [#allocation8], 4
      %s48 = int_to_ptr.vmem [resolvable:$true] %s47
      %53 = dma.hbm_to_vmem [thread:$0]  %s2, 8192, %s48, [#allocation7], 512, 512, 32
    $region13: #{tpu_custom_call.1} parent=1 // pred_fallthru
      _
    // Predicated region
    $region14: #{tpu_custom_call.1} parent=1 // pred_check
      _
    $region15: #{tpu_custom_call.1} parent=1 // pred_check_branch
      %55 = sbr.rel (0) target = $region17
    $region16: #{tpu_custom_call.1} parent=1 // pred_region
      _
    $region17: #{tpu_custom_call.1} parent=1 // pred_fallthru
      _
    // Predicated region
    $region18: #{tpu_custom_call.1} parent=1 // pred_check
      _
    $region19: #{tpu_custom_call.1} parent=1 // pred_check_branch
      %57 = sbr.rel (0) target = $region21
    $region20: #{tpu_custom_call.1} parent=1 // pred_region
      %s59 = ssub.s32 2048, 2048
      %60 = vsyncadd [#allocation10], %s59
      %s61 = sshll.u32 [#allocation9], 4
      %s62 = int_to_ptr.vmem [resolvable:$true] %s61
      %67 = dma.hbm_to_vmem [thread:$0]  %s4, 2048, %s62, [#allocation10], 128, 128, 8
    $region21: #{tpu_custom_call.1} parent=1 // pred_fallthru
      _
    // Predicated region
    $region22: #{tpu_custom_call.1} parent=1 // pred_check
      _
    $region23: #{tpu_custom_call.1} parent=1 // pred_check_branch
      %69 = sbr.rel (0) target = $region25
    $region24: #{tpu_custom_call.1} parent=1 // pred_region
      _
    $region25: #{tpu_custom_call.1} parent=1 // pred_fallthru
      _
    // Predicated region
    $region26: #{tpu_custom_call.1} parent=1 // pred_check
      _
    $region27: #{tpu_custom_call.1} parent=1 // pred_check_branch
      %71 = sbr.rel (0) target = $region29
    $region28: #{tpu_custom_call.1} parent=1 // pred_region
      %72 = dma.done [#allocation4], 1024
    $region29: #{tpu_custom_call.1} parent=1 // pred_fallthru
      _
    // Predicated region
    $region30: #{tpu_custom_call.1} parent=1 // pred_check
      _
    $region31: #{tpu_custom_call.1} parent=1 // pred_check_branch
      %74 = sbr.rel (0) target = $region33
    $region32: #{tpu_custom_call.1} parent=1 // pred_region
      %75 = dma.done [#allocation7], 4096
    $region33: #{tpu_custom_call.1} parent=1 // pred_fallthru
      _
    // Predicated region
    $region34: #{tpu_custom_call.1} parent=1 // pred_check
      _
    $region35: #{tpu_custom_call.1} parent=1 // pred_check_branch
      %77 = sbr.rel (0) target = $region37
    $region36: #{tpu_custom_call.1} parent=1 // pred_region
      %78 = dma.done [#allocation7], 8192
    $region37: #{tpu_custom_call.1} parent=1 // pred_fallthru
      _
    // Predicated region
    $region38: #{tpu_custom_call.1} parent=1 // pred_check
      _
    $region39: #{tpu_custom_call.1} parent=1 // pred_check_branch
      %80 = sbr.rel (0) target = $region41
    $region40: #{tpu_custom_call.1} parent=1 // pred_region
      %81 = dma.done [#allocation10], 2048
    $region41: #{tpu_custom_call.1} parent=1 // pred_fallthru
      _
    %v83 = vld [vmem:[#allocation3] sm:$0xff]
    %v84 = vld [vmem:[#allocation3 + $0x8] sm:$0xff]
    %v85 = vld [vmem:[#allocation3 + $0x10] sm:$0xff]
    %v86 = vld [vmem:[#allocation3 + $0x18] sm:$0xff]
    %v87 = vld [vmem:[#allocation3 + $0x20] sm:$0xff]
    %v88 = vld [vmem:[#allocation3 + $0x28] sm:$0xff]
    %v89 = vld [vmem:[#allocation3 + $0x30] sm:$0xff]
    %v90 = vld [vmem:[#allocation3 + $0x38] sm:$0xff]
    %v91 = vpack.c.bf16 %v84, %v83
    %v92 = vpack.c.bf16 %v86, %v85
    %v93 = vpack.c.bf16 %v88, %v87
    %v94 = vpack.c.bf16 %v90, %v89
    %v95 = vld [vmem:[#allocation6] sm:$0xff]
    %v96 = vld [vmem:[#allocation6 + $0x8] sm:$0xff]
    %v97 = vld [vmem:[#allocation6 + $0x10] sm:$0xff]
    %v98 = vld [vmem:[#allocation6 + $0x18] sm:$0xff]
    %v99 = vld [vmem:[#allocation6 + $0x20] sm:$0xff]
    %v100 = vld [vmem:[#allocation6 + $0x28] sm:$0xff]
    %v101 = vld [vmem:[#allocation6 + $0x30] sm:$0xff]
    %v102 = vld [vmem:[#allocation6 + $0x38] sm:$0xff]
    %v103 = vld [vmem:[#allocation6 + $0x40] sm:$0xff]
    %v104 = vld [vmem:[#allocation6 + $0x48] sm:$0xff]
    %v105 = vld [vmem:[#allocation6 + $0x50] sm:$0xff]
    %v106 = vld [vmem:[#allocation6 + $0x58] sm:$0xff]
    %v107 = vld [vmem:[#allocation6 + $0x60] sm:$0xff]
    %v108 = vld [vmem:[#allocation6 + $0x68] sm:$0xff]
    %v109 = vld [vmem:[#allocation6 + $0x70] sm:$0xff]
    %v110 = vld [vmem:[#allocation6 + $0x78] sm:$0xff]
    %v111 = vld [vmem:[#allocation6 + $0x80] sm:$0xff]
    %v112 = vld [vmem:[#allocation6 + $0x88] sm:$0xff]
    %v113 = vld [vmem:[#allocation6 + $0x90] sm:$0xff]
    %v114 = vld [vmem:[#allocation6 + $0x98] sm:$0xff]
    %v115 = vld [vmem:[#allocation6 + $0xa0] sm:$0xff]
    %v116 = vld [vmem:[#allocation6 + $0xa8] sm:$0xff]
    %v117 = vld [vmem:[#allocation6 + $0xb0] sm:$0xff]
    %v118 = vld [vmem:[#allocation6 + $0xb8] sm:$0xff]
    %v119 = vld [vmem:[#allocation6 + $0xc0] sm:$0xff]
    %v120 = vld [vmem:[#allocation6 + $0xc8] sm:$0xff]
    %v121 = vld [vmem:[#allocation6 + $0xd0] sm:$0xff]
    %v122 = vld [vmem:[#allocation6 + $0xd8] sm:$0xff]
    %v123 = vld [vmem:[#allocation6 + $0xe0] sm:$0xff]
    %v124 = vld [vmem:[#allocation6 + $0xe8] sm:$0xff]
    %v125 = vld [vmem:[#allocation6 + $0xf0] sm:$0xff]
    %v126 = vld [vmem:[#allocation6 + $0xf8] sm:$0xff]
    %v127 = vld [vmem:[%s3] sm:$0xf]
    %v129 = vlaneseq
    %v130 = vshrl.u32 %v129, 7
    %v131 = vsub.s32 0, %v130
    %v132 = vrot.slane %v127, %v131
    %v133 = vlaneseq
    %v134 = vshrl.u32 %v133, 7
    %v135 = vsub.s32 1, %v134
    %v136 = vrot.slane %v127, %v135
    %v137 = vlaneseq
    %v138 = vshrl.u32 %v137, 7
    %v139 = vsub.s32 2, %v138
    %v140 = vrot.slane %v127, %v139
    %v141 = vlaneseq
    %v142 = vshrl.u32 %v141, 7
    %v143 = vsub.s32 3, %v142
    %v144 = vrot.slane %v127, %v143
    %v181 = vunpack.c.l.b16 %v95
    %v182 = vunpack.c.h.b16 %v95
    %v183 = vunpack.c.l.b16 %v96
    %v184 = vunpack.c.h.b16 %v96
    %v185 = vunpack.c.l.b16 %v97
    %v186 = vunpack.c.h.b16 %v97
    %v187 = vunpack.c.l.b16 %v98
    %v188 = vunpack.c.h.b16 %v98
    %v189 = vunpack.c.l.b16 %v99
    %v190 = vunpack.c.h.b16 %v99
    %v191 = vunpack.c.l.b16 %v100
    %v192 = vunpack.c.h.b16 %v100
    %v193 = vunpack.c.l.b16 %v101
    %v194 = vunpack.c.h.b16 %v101
    %v195 = vunpack.c.l.b16 %v102
    %v196 = vunpack.c.h.b16 %v102
    %v197 = vunpack.c.l.b16 %v103
    %v198 = vunpack.c.h.b16 %v103
    %v199 = vunpack.c.l.b16 %v104
    %v200 = vunpack.c.h.b16 %v104
    %v201 = vunpack.c.l.b16 %v105
    %v202 = vunpack.c.h.b16 %v105
    %v203 = vunpack.c.l.b16 %v106
    %v204 = vunpack.c.h.b16 %v106
    %v205 = vunpack.c.l.b16 %v107
    %v206 = vunpack.c.h.b16 %v107
    %v207 = vunpack.c.l.b16 %v108
    %v208 = vunpack.c.h.b16 %v108
    %v209 = vunpack.c.l.b16 %v109
    %v210 = vunpack.c.h.b16 %v109
    %v211 = vunpack.c.l.b16 %v110
    %v212 = vunpack.c.h.b16 %v110
    %v213 = vunpack.c.l.b16 %v111
    %v214 = vunpack.c.h.b16 %v111
    %v215 = vunpack.c.l.b16 %v112
    %v216 = vunpack.c.h.b16 %v112
    %v217 = vunpack.c.l.b16 %v113
    %v218 = vunpack.c.h.b16 %v113
    %v219 = vunpack.c.l.b16 %v114
    %v220 = vunpack.c.h.b16 %v114
    %v221 = vunpack.c.l.b16 %v115
    %v222 = vunpack.c.h.b16 %v115
    %v223 = vunpack.c.l.b16 %v116
    %v224 = vunpack.c.h.b16 %v116
    %v225 = vunpack.c.l.b16 %v117
    %v226 = vunpack.c.h.b16 %v117
    %v227 = vunpack.c.l.b16 %v118
    %v228 = vunpack.c.h.b16 %v118
    %v229 = vunpack.c.l.b16 %v119
    %v230 = vunpack.c.h.b16 %v119
    %v231 = vunpack.c.l.b16 %v120
    %v232 = vunpack.c.h.b16 %v120
    %v233 = vunpack.c.l.b16 %v121
    %v234 = vunpack.c.h.b16 %v121
    %v235 = vunpack.c.l.b16 %v122
    %v236 = vunpack.c.h.b16 %v122
    %v237 = vunpack.c.l.b16 %v123
    %v238 = vunpack.c.h.b16 %v123
    %v239 = vunpack.c.l.b16 %v124
    %v240 = vunpack.c.h.b16 %v124
    %v241 = vunpack.c.l.b16 %v125
    %v242 = vunpack.c.h.b16 %v125
    %v243 = vunpack.c.l.b16 %v126
    %v244 = vunpack.c.h.b16 %v126
    %v245 = vpack.c.b16 %v185, %v181
    %v246 = vpack.c.b16 %v186, %v182
    %v247 = vpack.c.b16 %v187, %v183
    %v248 = vpack.c.b16 %v188, %v184
    %v249 = vpack.c.b16 %v193, %v189
    %v250 = vpack.c.b16 %v194, %v190
    %v251 = vpack.c.b16 %v195, %v191
    %v252 = vpack.c.b16 %v196, %v192
    %v253 = vpack.c.b16 %v201, %v197
    %v254 = vpack.c.b16 %v202, %v198
    %v255 = vpack.c.b16 %v203, %v199
    %v256 = vpack.c.b16 %v204, %v200
    %v257 = vpack.c.b16 %v209, %v205
    %v258 = vpack.c.b16 %v210, %v206
    %v259 = vpack.c.b16 %v211, %v207
    %v260 = vpack.c.b16 %v212, %v208
    %v261 = vpack.c.b16 %v217, %v213
    %v262 = vpack.c.b16 %v218, %v214
    %v263 = vpack.c.b16 %v219, %v215
    %v264 = vpack.c.b16 %v220, %v216
    %v265 = vpack.c.b16 %v225, %v221
    %v266 = vpack.c.b16 %v226, %v222
    %v267 = vpack.c.b16 %v227, %v223
    %v268 = vpack.c.b16 %v228, %v224
    %v269 = vpack.c.b16 %v233, %v229
    %v270 = vpack.c.b16 %v234, %v230
    %v271 = vpack.c.b16 %v235, %v231
    %v272 = vpack.c.b16 %v236, %v232
    %v273 = vpack.c.b16 %v241, %v237
    %v274 = vpack.c.b16 %v242, %v238
    %v275 = vpack.c.b16 %v243, %v239
    %v276 = vpack.c.b16 %v244, %v240
    %309 = vmatprep.subr.bf16.mxu0 %v274
    %310 = vmatpush1.bf16.msra.mxu0 %v273
    %311 = vmatprep.subr.bf16.mxu0 %v270
    %312 = vmatpush1.bf16.msra.mxu0 %v269
    %313 = vmatprep.subr.bf16.mxu0 %v266
    %314 = vmatpush1.bf16.msra.mxu0 %v265
    %315 = vmatprep.subr.bf16.mxu0 %v262
    %316 = vmatpush1.bf16.msra.mxu0 %v261
    %317 = vmatprep.subr.bf16.mxu0 %v258
    %318 = vmatpush1.bf16.msra.mxu0 %v257
    %319 = vmatprep.subr.bf16.mxu0 %v254
    %320 = vmatpush1.bf16.msra.mxu0 %v253
    %321 = vmatprep.subr.bf16.mxu0 %v250
    %322 = vmatpush1.bf16.msra.mxu0 %v249
    %323 = vmatprep.subr.bf16.mxu0 %v246
    %324 = vmatpush1.bf16.msra.mxu0 %v245
    %325 = vmatprep.subr.bf16.mxu0 0
    %326 = vmatpush2.bf16.msra.mxu0 0
    %327 = vmatprep.subr.bf16.mxu0 0
    %328 = vmatpush2.bf16.msra.mxu0 0
    %329 = vmatprep.subr.bf16.mxu0 0
    %330 = vmatpush2.bf16.msra.mxu0 0
    %331 = vmatprep.subr.bf16.mxu0 0
    %332 = vmatpush2.bf16.msra.mxu0 0
    %333 = vmatprep.subr.bf16.mxu0 0
    %334 = vmatpush2.bf16.msra.mxu0 0
    %335 = vmatprep.subr.bf16.mxu0 0
    %336 = vmatpush2.bf16.msra.mxu0 0
    %337 = vmatprep.subr.bf16.mxu0 0
    %338 = vmatpush2.bf16.msra.mxu0 0
    %339 = vmatprep.subr.bf16.mxu0 0
    %340 = vmatpush2.bf16.msra.mxu0 0
    %341 = vmatprep.mubr.bf16.mxu0 0
    %342 = vmatmul.mubr.bf16.gmra.mxu0 %v91
    %v343 = vpop.f32.mrf.mxu0
    %v344 = vadd.f32 %v132, %v343
    %v345 = vpop.f32.mrf.mxu0
    %v346 = vadd.f32 %v136, %v345
    %v347 = vpop.f32.mrf.mxu0
    %v348 = vadd.f32 %v132, %v347
    %v349 = vpop.f32.mrf.mxu0
    %v350 = vadd.f32 %v136, %v349
    %351 = vmatprep.mubr.bf16.mxu0 0
    %352 = vmatmul.mubr.bf16.gmra.mxu0 %v92
    %v353 = vpop.f32.mrf.mxu0
    %v354 = vadd.f32 %v132, %v353
    %v355 = vpop.f32.mrf.mxu0
    %v356 = vadd.f32 %v136, %v355
    %v357 = vpop.f32.mrf.mxu0
    %v358 = vadd.f32 %v132, %v357
    %v359 = vpop.f32.mrf.mxu0
    %v360 = vadd.f32 %v136, %v359
    %361 = vmatprep.mubr.bf16.mxu0 0
    %362 = vmatmul.mubr.bf16.gmra.mxu0 %v93
    %v363 = vpop.f32.mrf.mxu0
    %v364 = vadd.f32 %v132, %v363
    %v365 = vpop.f32.mrf.mxu0
    %v366 = vadd.f32 %v136, %v365
    %v367 = vpop.f32.mrf.mxu0
    %v368 = vadd.f32 %v132, %v367
    %v369 = vpop.f32.mrf.mxu0
    %v370 = vadd.f32 %v136, %v369
    %371 = vmatprep.mubr.bf16.mxu0 0
    %372 = vmatmul.mubr.bf16.gmra.mxu0 %v94
    %v373 = vpop.f32.mrf.mxu0
    %v374 = vadd.f32 %v132, %v373
    %v375 = vpop.f32.mrf.mxu0
    %v376 = vadd.f32 %v136, %v375
    %v377 = vpop.f32.mrf.mxu0
    %v378 = vadd.f32 %v132, %v377
    %v379 = vpop.f32.mrf.mxu0
    %v380 = vadd.f32 %v136, %v379
    %381 = vdwg.mxu0
    %382 = vmatprep.subr.bf16.mxu0 %v276
    %383 = vmatpush1.bf16.msra.mxu0 %v275
    %384 = vmatprep.subr.bf16.mxu0 %v272
    %385 = vmatpush1.bf16.msra.mxu0 %v271
    %386 = vmatprep.subr.bf16.mxu0 %v268
    %387 = vmatpush1.bf16.msra.mxu0 %v267
    %388 = vmatprep.subr.bf16.mxu0 %v264
    %389 = vmatpush1.bf16.msra.mxu0 %v263
    %390 = vmatprep.subr.bf16.mxu0 %v260
    %391 = vmatpush1.bf16.msra.mxu0 %v259
    %392 = vmatprep.subr.bf16.mxu0 %v256
    %393 = vmatpush1.bf16.msra.mxu0 %v255
    %394 = vmatprep.subr.bf16.mxu0 %v252
    %395 = vmatpush1.bf16.msra.mxu0 %v251
    %396 = vmatprep.subr.bf16.mxu0 %v248
    %397 = vmatpush1.bf16.msra.mxu0 %v247
    %398 = vmatprep.subr.bf16.mxu0 0
    %399 = vmatpush2.bf16.msra.mxu0 0
    %400 = vmatprep.subr.bf16.mxu0 0
    %401 = vmatpush2.bf16.msra.mxu0 0
    %402 = vmatprep.subr.bf16.mxu0 0
    %403 = vmatpush2.bf16.msra.mxu0 0
    %404 = vmatprep.subr.bf16.mxu0 0
    %405 = vmatpush2.bf16.msra.mxu0 0
    %406 = vmatprep.subr.bf16.mxu0 0
    %407 = vmatpush2.bf16.msra.mxu0 0
    %408 = vmatprep.subr.bf16.mxu0 0
    %409 = vmatpush2.bf16.msra.mxu0 0
    %410 = vmatprep.subr.bf16.mxu0 0
    %411 = vmatpush2.bf16.msra.mxu0 0
    %412 = vmatprep.subr.bf16.mxu0 0
    %413 = vmatpush2.bf16.msra.mxu0 0
    %414 = vmatprep.mubr.bf16.mxu0 0
    %415 = vmatmul.mubr.bf16.gmra.mxu0 %v91
    %v416 = vpop.f32.mrf.mxu0
    %v417 = vadd.f32 %v140, %v416
    %v418 = vpop.f32.mrf.mxu0
    %v419 = vadd.f32 %v144, %v418
    %v420 = vpop.f32.mrf.mxu0
    %v421 = vadd.f32 %v140, %v420
    %v422 = vpop.f32.mrf.mxu0
    %v423 = vadd.f32 %v144, %v422
    %424 = vmatprep.mubr.bf16.mxu0 0
    %425 = vmatmul.mubr.bf16.gmra.mxu0 %v92
    %v426 = vpop.f32.mrf.mxu0
    %v427 = vadd.f32 %v140, %v426
    %v428 = vpop.f32.mrf.mxu0
    %v429 = vadd.f32 %v144, %v428
    %v430 = vpop.f32.mrf.mxu0
    %v431 = vadd.f32 %v140, %v430
    %v432 = vpop.f32.mrf.mxu0
    %v433 = vadd.f32 %v144, %v432
    %434 = vmatprep.mubr.bf16.mxu0 0
    %435 = vmatmul.mubr.bf16.gmra.mxu0 %v93
    %v436 = vpop.f32.mrf.mxu0
    %v437 = vadd.f32 %v140, %v436
    %v438 = vpop.f32.mrf.mxu0
    %v439 = vadd.f32 %v144, %v438
    %v440 = vpop.f32.mrf.mxu0
    %v441 = vadd.f32 %v140, %v440
    %v442 = vpop.f32.mrf.mxu0
    %v443 = vadd.f32 %v144, %v442
    %444 = vmatprep.mubr.bf16.mxu0 0
    %445 = vmatmul.mubr.bf16.gmra.mxu0 %v94
    %v446 = vpop.f32.mrf.mxu0
    %v447 = vadd.f32 %v140, %v446
    %v448 = vpop.f32.mrf.mxu0
    %v449 = vadd.f32 %v144, %v448
    %v450 = vpop.f32.mrf.mxu0
    %v451 = vadd.f32 %v140, %v450
    %v452 = vpop.f32.mrf.mxu0
    %v453 = vadd.f32 %v144, %v452
    %454 = vdwg.mxu0
    %455 = vst [vmem:[#allocation2] sm:$0xff] %v344
    %456 = vst [vmem:[#allocation2 + $0x8] sm:$0xff] %v346
    %457 = vst [vmem:[#allocation2 + $0x10] sm:$0xff] %v417
    %458 = vst [vmem:[#allocation2 + $0x18] sm:$0xff] %v419
    %459 = vst [vmem:[#allocation2 + $0x20] sm:$0xff] %v348
    %460 = vst [vmem:[#allocation2 + $0x28] sm:$0xff] %v350
    %461 = vst [vmem:[#allocation2 + $0x30] sm:$0xff] %v421
    %462 = vst [vmem:[#allocation2 + $0x38] sm:$0xff] %v423
    %463 = vst [vmem:[#allocation2 + $0x40] sm:$0xff] %v354
    %464 = vst [vmem:[#allocation2 + $0x48] sm:$0xff] %v356
    %465 = vst [vmem:[#allocation2 + $0x50] sm:$0xff] %v427
    %466 = vst [vmem:[#allocation2 + $0x58] sm:$0xff] %v429
    %467 = vst [vmem:[#allocation2 + $0x60] sm:$0xff] %v358
    %468 = vst [vmem:[#allocation2 + $0x68] sm:$0xff] %v360
    %469 = vst [vmem:[#allocation2 + $0x70] sm:$0xff] %v431
    %470 = vst [vmem:[#allocation2 + $0x78] sm:$0xff] %v433
    %471 = vst [vmem:[#allocation2 + $0x80] sm:$0xff] %v364
    %472 = vst [vmem:[#allocation2 + $0x88] sm:$0xff] %v366
    %473 = vst [vmem:[#allocation2 + $0x90] sm:$0xff] %v437
    %474 = vst [vmem:[#allocation2 + $0x98] sm:$0xff] %v439
    %475 = vst [vmem:[#allocation2 + $0xa0] sm:$0xff] %v368
    %476 = vst [vmem:[#allocation2 + $0xa8] sm:$0xff] %v370
    %477 = vst [vmem:[#allocation2 + $0xb0] sm:$0xff] %v441
    %478 = vst [vmem:[#allocation2 + $0xb8] sm:$0xff] %v443
    %479 = vst [vmem:[#allocation2 + $0xc0] sm:$0xff] %v374
    %480 = vst [vmem:[#allocation2 + $0xc8] sm:$0xff] %v376
    %481 = vst [vmem:[#allocation2 + $0xd0] sm:$0xff] %v447
    %482 = vst [vmem:[#allocation2 + $0xd8] sm:$0xff] %v449
    %483 = vst [vmem:[#allocation2 + $0xe0] sm:$0xff] %v378
    %484 = vst [vmem:[#allocation2 + $0xe8] sm:$0xff] %v380
    %485 = vst [vmem:[#allocation2 + $0xf0] sm:$0xff] %v451
    %486 = vst [vmem:[#allocation2 + $0xf8] sm:$0xff] %v453
    %v487 = vld [vmem:[#allocation8] sm:$0xff]
    %v488 = vld [vmem:[#allocation8 + $0x8] sm:$0xff]
    %v489 = vld [vmem:[#allocation8 + $0x10] sm:$0xff]
    %v490 = vld [vmem:[#allocation8 + $0x18] sm:$0xff]
    %v491 = vld [vmem:[#allocation8 + $0x20] sm:$0xff]
    %v492 = vld [vmem:[#allocation8 + $0x28] sm:$0xff]
    %v493 = vld [vmem:[#allocation8 + $0x30] sm:$0xff]
    %v494 = vld [vmem:[#allocation8 + $0x38] sm:$0xff]
    %v495 = vld [vmem:[#allocation8 + $0x40] sm:$0xff]
    %v496 = vld [vmem:[#allocation8 + $0x48] sm:$0xff]
    %v497 = vld [vmem:[#allocation8 + $0x50] sm:$0xff]
    %v498 = vld [vmem:[#allocation8 + $0x58] sm:$0xff]
    %v499 = vld [vmem:[#allocation8 + $0x60] sm:$0xff]
    %v500 = vld [vmem:[#allocation8 + $0x68] sm:$0xff]
    %v501 = vld [vmem:[#allocation8 + $0x70] sm:$0xff]
    %v502 = vld [vmem:[#allocation8 + $0x78] sm:$0xff]
    %v503 = vld [vmem:[#allocation8 + $0x80] sm:$0xff]
    %v504 = vld [vmem:[#allocation8 + $0x88] sm:$0xff]
    %v505 = vld [vmem:[#allocation8 + $0x90] sm:$0xff]
    %v506 = vld [vmem:[#allocation8 + $0x98] sm:$0xff]
    %v507 = vld [vmem:[#allocation8 + $0xa0] sm:$0xff]
    %v508 = vld [vmem:[#allocation8 + $0xa8] sm:$0xff]
    %v509 = vld [vmem:[#allocation8 + $0xb0] sm:$0xff]
    %v510 = vld [vmem:[#allocation8 + $0xb8] sm:$0xff]
    %v511 = vld [vmem:[#allocation8 + $0xc0] sm:$0xff]
    %v512 = vld [vmem:[#allocation8 + $0xc8] sm:$0xff]
    %v513 = vld [vmem:[#allocation8 + $0xd0] sm:$0xff]
    %v514 = vld [vmem:[#allocation8 + $0xd8] sm:$0xff]
    %v515 = vld [vmem:[#allocation8 + $0xe0] sm:$0xff]
    %v516 = vld [vmem:[#allocation8 + $0xe8] sm:$0xff]
    %v517 = vld [vmem:[#allocation8 + $0xf0] sm:$0xff]
    %v518 = vld [vmem:[#allocation8 + $0xf8] sm:$0xff]
    %v519 = vld [vmem:[#allocation8 + $0x100] sm:$0xff]
    %v520 = vld [vmem:[#allocation8 + $0x108] sm:$0xff]
    %v521 = vld [vmem:[#allocation8 + $0x110] sm:$0xff]
    %v522 = vld [vmem:[#allocation8 + $0x118] sm:$0xff]
    %v523 = vld [vmem:[#allocation8 + $0x120] sm:$0xff]
    %v524 = vld [vmem:[#allocation8 + $0x128] sm:$0xff]
    %v525 = vld [vmem:[#allocation8 + $0x130] sm:$0xff]
    %v526 = vld [vmem:[#allocation8 + $0x138] sm:$0xff]
    %v527 = vld [vmem:[#allocation8 + $0x140] sm:$0xff]
    %v528 = vld [vmem:[#allocation8 + $0x148] sm:$0xff]
    %v529 = vld [vmem:[#allocation8 + $0x150] sm:$0xff]
    %v530 = vld [vmem:[#allocation8 + $0x158] sm:$0xff]
    %v531 = vld [vmem:[#allocation8 + $0x160] sm:$0xff]
    %v532 = vld [vmem:[#allocation8 + $0x168] sm:$0xff]
    %v533 = vld [vmem:[#allocation8 + $0x170] sm:$0xff]
    %v534 = vld [vmem:[#allocation8 + $0x178] sm:$0xff]
    %v535 = vld [vmem:[#allocation8 + $0x180] sm:$0xff]
    %v536 = vld [vmem:[#allocation8 + $0x188] sm:$0xff]
    %v537 = vld [vmem:[#allocation8 + $0x190] sm:$0xff]
    %v538 = vld [vmem:[#allocation8 + $0x198] sm:$0xff]
    %v539 = vld [vmem:[#allocation8 + $0x1a0] sm:$0xff]
    %v540 = vld [vmem:[#allocation8 + $0x1a8] sm:$0xff]
    %v541 = vld [vmem:[#allocation8 + $0x1b0] sm:$0xff]
    %v542 = vld [vmem:[#allocation8 + $0x1b8] sm:$0xff]
    %v543 = vld [vmem:[#allocation8 + $0x1c0] sm:$0xff]
    %v544 = vld [vmem:[#allocation8 + $0x1c8] sm:$0xff]
    %v545 = vld [vmem:[#allocation8 + $0x1d0] sm:$0xff]
    %v546 = vld [vmem:[#allocation8 + $0x1d8] sm:$0xff]
    %v547 = vld [vmem:[#allocation8 + $0x1e0] sm:$0xff]
    %v548 = vld [vmem:[#allocation8 + $0x1e8] sm:$0xff]
    %v549 = vld [vmem:[#allocation8 + $0x1f0] sm:$0xff]
    %v550 = vld [vmem:[#allocation8 + $0x1f8] sm:$0xff]
    %s551 = smul.u32 0, 4
    %s552 = smul.addr %s551, 8
    %s553 = scalar_lea.vmem [#allocation2], %s552
    %v554 = vld [vmem:[%s553] sm:$0xff]
    %v555 = vld [vmem:[%s553 + $0x8] sm:$0xff]
    %v556 = vld [vmem:[%s553 + $0x10] sm:$0xff]
    %v557 = vld [vmem:[%s553 + $0x18] sm:$0xff]
    %558 = vmatprep.subr.mxu0 %v548
    %559 = vmatpush1.msra.mxu0 %v547
    %560 = vmatprep.subr.mxu0 %v544
    %561 = vmatpush1.msra.mxu0 %v543
    %562 = vmatprep.subr.mxu0 %v540
    %563 = vmatpush1.msra.mxu0 %v539
    %564 = vmatprep.subr.mxu0 %v536
    %565 = vmatpush1.msra.mxu0 %v535
    %566 = vmatprep.subr.mxu0 %v532
    %567 = vmatpush1.msra.mxu0 %v531
    %568 = vmatprep.subr.mxu0 %v528
    %569 = vmatpush1.msra.mxu0 %v527
    %570 = vmatprep.subr.mxu0 %v524
    %571 = vmatpush1.msra.mxu0 %v523
    %572 = vmatprep.subr.mxu0 %v520
    %573 = vmatpush1.msra.mxu0 %v519
    %574 = vmatprep.subr.mxu0 %v516
    %575 = vmatpush1.msra.mxu0 %v515
    %576 = vmatprep.subr.mxu0 %v512
    %577 = vmatpush1.msra.mxu0 %v511
    %578 = vmatprep.subr.mxu0 %v508
    %579 = vmatpush1.msra.mxu0 %v507
    %580 = vmatprep.subr.mxu0 %v504
    %581 = vmatpush1.msra.mxu0 %v503
    %582 = vmatprep.subr.mxu0 %v500
    %583 = vmatpush1.msra.mxu0 %v499
    %584 = vmatprep.subr.mxu0 %v496
    %585 = vmatpush1.msra.mxu0 %v495
    %586 = vmatprep.subr.mxu0 %v492
    %587 = vmatpush1.msra.mxu0 %v491
    %588 = vmatprep.subr.mxu0 %v488
    %589 = vmatpush1.msra.mxu0 %v487
    %590 = vmatprep.subr.mxu0 0.0
    %591 = vmatpush2.msra.mxu0 0.0
    %592 = vmatprep.subr.mxu0 0.0
    %593 = vmatpush2.msra.mxu0 0.0
    %594 = vmatprep.subr.mxu0 0.0
    %595 = vmatpush2.msra.mxu0 0.0
    %596 = vmatprep.subr.mxu0 0.0
    %597 = vmatpush2.msra.mxu0 0.0
    %598 = vmatprep.subr.mxu0 0.0
    %599 = vmatpush2.msra.mxu0 0.0
    %600 = vmatprep.subr.mxu0 0.0
    %601 = vmatpush2.msra.mxu0 0.0
    %602 = vmatprep.subr.mxu0 0.0
    %603 = vmatpush2.msra.mxu0 0.0
    %604 = vmatprep.subr.mxu0 0.0
    %605 = vmatpush2.msra.mxu0 0.0
    %606 = vmatprep.subr.mxu0 0.0
    %607 = vmatpush2.msra.mxu0 0.0
    %608 = vmatprep.subr.mxu0 0.0
    %609 = vmatpush2.msra.mxu0 0.0
    %610 = vmatprep.subr.mxu0 0.0
    %611 = vmatpush2.msra.mxu0 0.0
    %612 = vmatprep.subr.mxu0 0.0
    %613 = vmatpush2.msra.mxu0 0.0
    %614 = vmatprep.subr.mxu0 0.0
    %615 = vmatpush2.msra.mxu0 0.0
    %616 = vmatprep.subr.mxu0 0.0
    %617 = vmatpush2.msra.mxu0 0.0
    %618 = vmatprep.subr.mxu0 0.0
    %619 = vmatpush2.msra.mxu0 0.0
    %620 = vmatprep.subr.mxu0 0.0
    %621 = vmatpush2.msra.mxu0 0.0
    %622 = vmatprep.mubr.f32.mxu0 0.0
    %623 = vmatmul.mubr.f32.gmra.mxu0 0.0
    %v624 = vpop.f32.mrf.mxu0
    %v625 = vadd.f32 0.0, %v624
    %v626 = vpop.f32.mrf.mxu0
    %v627 = vadd.f32 0.0, %v626
    %628 = vdwg.mxu0
    %629 = vmatprep.subr.mxu0 %v550
    %630 = vmatpush1.msra.mxu0 %v549
    %631 = vmatprep.subr.mxu0 %v546
    %632 = vmatpush1.msra.mxu0 %v545
    %633 = vmatprep.subr.mxu0 %v542
    %634 = vmatpush1.msra.mxu0 %v541
    %635 = vmatprep.subr.mxu0 %v538
    %636 = vmatpush1.msra.mxu0 %v537
    %637 = vmatprep.subr.mxu0 %v534
    %638 = vmatpush1.msra.mxu0 %v533
    %639 = vmatprep.subr.mxu0 %v530
    %640 = vmatpush1.msra.mxu0 %v529
    %641 = vmatprep.subr.mxu0 %v526
    %642 = vmatpush1.msra.mxu0 %v525
    %643 = vmatprep.subr.mxu0 %v522
    %644 = vmatpush1.msra.mxu0 %v521
    %645 = vmatprep.subr.mxu0 %v518
    %646 = vmatpush1.msra.mxu0 %v517
    %647 = vmatprep.subr.mxu0 %v514
    %648 = vmatpush1.msra.mxu0 %v513
    %649 = vmatprep.subr.mxu0 %v510
    %650 = vmatpush1.msra.mxu0 %v509
    %651 = vmatprep.subr.mxu0 %v506
    %652 = vmatpush1.msra.mxu0 %v505
    %653 = vmatprep.subr.mxu0 %v502
    %654 = vmatpush1.msra.mxu0 %v501
    %655 = vmatprep.subr.mxu0 %v498
    %656 = vmatpush1.msra.mxu0 %v497
    %657 = vmatprep.subr.mxu0 %v494
    %658 = vmatpush1.msra.mxu0 %v493
    %659 = vmatprep.subr.mxu0 %v490
    %660 = vmatpush1.msra.mxu0 %v489
    %661 = vmatprep.subr.mxu0 0.0
    %662 = vmatpush2.msra.mxu0 0.0
    %663 = vmatprep.subr.mxu0 0.0
    %664 = vmatpush2.msra.mxu0 0.0
    %665 = vmatprep.subr.mxu0 0.0
    %666 = vmatpush2.msra.mxu0 0.0
    %667 = vmatprep.subr.mxu0 0.0
    %668 = vmatpush2.msra.mxu0 0.0
    %669 = vmatprep.subr.mxu0 0.0
    %670 = vmatpush2.msra.mxu0 0.0
    %671 = vmatprep.subr.mxu0 0.0
    %672 = vmatpush2.msra.mxu0 0.0
    %673 = vmatprep.subr.mxu0 0.0
    %674 = vmatpush2.msra.mxu0 0.0
    %675 = vmatprep.subr.mxu0 0.0
    %676 = vmatpush2.msra.mxu0 0.0
    %677 = vmatprep.subr.mxu0 0.0
    %678 = vmatpush2.msra.mxu0 0.0
    %679 = vmatprep.subr.mxu0 0.0
    %680 = vmatpush2.msra.mxu0 0.0
    %681 = vmatprep.subr.mxu0 0.0
    %682 = vmatpush2.msra.mxu0 0.0
    %683 = vmatprep.subr.mxu0 0.0
    %684 = vmatpush2.msra.mxu0 0.0
    %685 = vmatprep.subr.mxu0 0.0
    %686 = vmatpush2.msra.mxu0 0.0
    %687 = vmatprep.subr.mxu0 0.0
    %688 = vmatpush2.msra.mxu0 0.0
    %689 = vmatprep.subr.mxu0 0.0
    %690 = vmatpush2.msra.mxu0 0.0
    %691 = vmatprep.subr.mxu0 0.0
    %692 = vmatpush2.msra.mxu0 0.0
    %693 = vmatprep.mubr.f32.mxu0 0.0
    %694 = vmatmul.mubr.f32.gmra.mxu0 0.0
    %v695 = vpop.f32.mrf.mxu0
    %v696 = vadd.f32 0.0, %v695
    %v697 = vpop.f32.mrf.mxu0
    %v698 = vadd.f32 0.0, %v697
    %699 = vdwg.mxu0
    %v700 = vadd.f32 %v554, %v625
    %v701 = vadd.f32 %v555, %v627
    %v702 = vadd.f32 %v556, %v696
    %v703 = vadd.f32 %v557, %v698
    %v704 = vxor.u32 %v700, 2147483648
    %v705 = vmul.f32 %v704, 1.442695
    %v706 = vpow.pop %v705
    %v707 = vadd.f32 %v706, 1.0
    %v708 = vrcp.pop %v707
    %v709 = vmul.f32 1.0, %v708
    %v710 = vxor.u32 %v701, 2147483648
    %v711 = vmul.f32 %v710, 1.442695
    %v712 = vpow.pop %v711
    %v713 = vadd.f32 %v712, 1.0
    %v714 = vrcp.pop %v713
    %v715 = vmul.f32 1.0, %v714
    %v716 = vtanh.pop %v702
    %v717 = vxor.u32 %v703, 2147483648
    %v718 = vmul.f32 %v717, 1.442695
    %v719 = vpow.pop %v718
    %v720 = vadd.f32 %v719, 1.0
    %v721 = vrcp.pop %v720
    %v722 = vmul.f32 1.0, %v721
    %v723 = vmul.f32 %v715, 0.0
    %v724 = vmul.f32 %v709, %v716
    %v725 = vadd.f32 %v723, %v724
    %v726 = vtanh.pop %v725
    %v727 = vmul.f32 %v722, %v726
    %s728 = smul.u32 1, 4
    %s729 = smul.addr %s728, 8
    %s730 = scalar_lea.vmem [#allocation2], %s729
    %v731 = vld [vmem:[%s730] sm:$0xff]
    %v732 = vld [vmem:[%s730 + $0x8] sm:$0xff]
    %v733 = vld [vmem:[%s730 + $0x10] sm:$0xff]
    %v734 = vld [vmem:[%s730 + $0x18] sm:$0xff]
    %735 = vmatprep.subr.mxu0 %v548
    %736 = vmatpush1.msra.mxu0 %v547
    %737 = vmatprep.subr.mxu0 %v544
    %738 = vmatpush1.msra.mxu0 %v543
    %739 = vmatprep.subr.mxu0 %v540
    %740 = vmatpush1.msra.mxu0 %v539
    %741 = vmatprep.subr.mxu0 %v536
    %742 = vmatpush1.msra.mxu0 %v535
    %743 = vmatprep.subr.mxu0 %v532
    %744 = vmatpush1.msra.mxu0 %v531
    %745 = vmatprep.subr.mxu0 %v528
    %746 = vmatpush1.msra.mxu0 %v527
    %747 = vmatprep.subr.mxu0 %v524
    %748 = vmatpush1.msra.mxu0 %v523
    %749 = vmatprep.subr.mxu0 %v520
    %750 = vmatpush1.msra.mxu0 %v519
    %751 = vmatprep.subr.mxu0 %v516
    %752 = vmatpush1.msra.mxu0 %v515
    %753 = vmatprep.subr.mxu0 %v512
    %754 = vmatpush1.msra.mxu0 %v511
    %755 = vmatprep.subr.mxu0 %v508
    %756 = vmatpush1.msra.mxu0 %v507
    %757 = vmatprep.subr.mxu0 %v504
    %758 = vmatpush1.msra.mxu0 %v503
    %759 = vmatprep.subr.mxu0 %v500
    %760 = vmatpush1.msra.mxu0 %v499
    %761 = vmatprep.subr.mxu0 %v496
    %762 = vmatpush1.msra.mxu0 %v495
    %763 = vmatprep.subr.mxu0 %v492
    %764 = vmatpush1.msra.mxu0 %v491
    %765 = vmatprep.subr.mxu0 %v488
    %766 = vmatpush1.msra.mxu0 %v487
    %767 = vmatprep.subr.mxu0 0.0
    %768 = vmatpush2.msra.mxu0 0.0
    %769 = vmatprep.subr.mxu0 0.0
    %770 = vmatpush2.msra.mxu0 0.0
    %771 = vmatprep.subr.mxu0 0.0
    %772 = vmatpush2.msra.mxu0 0.0
    %773 = vmatprep.subr.mxu0 0.0
    %774 = vmatpush2.msra.mxu0 0.0
    %775 = vmatprep.subr.mxu0 0.0
    %776 = vmatpush2.msra.mxu0 0.0
    %777 = vmatprep.subr.mxu0 0.0
    %778 = vmatpush2.msra.mxu0 0.0
    %779 = vmatprep.subr.mxu0 0.0
    %780 = vmatpush2.msra.mxu0 0.0
    %781 = vmatprep.subr.mxu0 0.0
    %782 = vmatpush2.msra.mxu0 0.0
    %783 = vmatprep.subr.mxu0 0.0
    %784 = vmatpush2.msra.mxu0 0.0
    %785 = vmatprep.subr.mxu0 0.0
    %786 = vmatpush2.msra.mxu0 0.0
    %787 = vmatprep.subr.mxu0 0.0
    %788 = vmatpush2.msra.mxu0 0.0
    %789 = vmatprep.subr.mxu0 0.0
    %790 = vmatpush2.msra.mxu0 0.0
    %791 = vmatprep.subr.mxu0 0.0
    %792 = vmatpush2.msra.mxu0 0.0
    %793 = vmatprep.subr.mxu0 0.0
    %794 = vmatpush2.msra.mxu0 0.0
    %795 = vmatprep.subr.mxu0 0.0
    %796 = vmatpush2.msra.mxu0 0.0
    %797 = vmatprep.subr.mxu0 0.0
    %798 = vmatpush2.msra.mxu0 0.0
    %799 = vmatprep.mubr.f32.mxu0 0.0
    %800 = vmatmul.mubr.f32.gmra.mxu0 %v727
    %v801 = vpop.f32.mrf.mxu0
    %v802 = vadd.f32 0.0, %v801
    %v803 = vpop.f32.mrf.mxu0
    %v804 = vadd.f32 0.0, %v803
    %805 = vdwg.mxu0
    %806 = vmatprep.subr.mxu0 %v550
    %807 = vmatpush1.msra.mxu0 %v549
    %808 = vmatprep.subr.mxu0 %v546
    %809 = vmatpush1.msra.mxu0 %v545
    %810 = vmatprep.subr.mxu0 %v542
    %811 = vmatpush1.msra.mxu0 %v541
    %812 = vmatprep.subr.mxu0 %v538
    %813 = vmatpush1.msra.mxu0 %v537
    %814 = vmatprep.subr.mxu0 %v534
    %815 = vmatpush1.msra.mxu0 %v533
    %816 = vmatprep.subr.mxu0 %v530
    %817 = vmatpush1.msra.mxu0 %v529
    %818 = vmatprep.subr.mxu0 %v526
    %819 = vmatpush1.msra.mxu0 %v525
    %820 = vmatprep.subr.mxu0 %v522
    %821 = vmatpush1.msra.mxu0 %v521
    %822 = vmatprep.subr.mxu0 %v518
    %823 = vmatpush1.msra.mxu0 %v517
    %824 = vmatprep.subr.mxu0 %v514
    %825 = vmatpush1.msra.mxu0 %v513
    %826 = vmatprep.subr.mxu0 %v510
    %827 = vmatpush1.msra.mxu0 %v509
    %828 = vmatprep.subr.mxu0 %v506
    %829 = vmatpush1.msra.mxu0 %v505
    %830 = vmatprep.subr.mxu0 %v502
    %831 = vmatpush1.msra.mxu0 %v501
    %832 = vmatprep.subr.mxu0 %v498
    %833 = vmatpush1.msra.mxu0 %v497
    %834 = vmatprep.subr.mxu0 %v494
    %835 = vmatpush1.msra.mxu0 %v493
    %836 = vmatprep.subr.mxu0 %v490
    %837 = vmatpush1.msra.mxu0 %v489
    %838 = vmatprep.subr.mxu0 0.0
    %839 = vmatpush2.msra.mxu0 0.0
    %840 = vmatprep.subr.mxu0 0.0
    %841 = vmatpush2.msra.mxu0 0.0
    %842 = vmatprep.subr.mxu0 0.0
    %843 = vmatpush2.msra.mxu0 0.0
    %844 = vmatprep.subr.mxu0 0.0
    %845 = vmatpush2.msra.mxu0 0.0
    %846 = vmatprep.subr.mxu0 0.0
    %847 = vmatpush2.msra.mxu0 0.0
    %848 = vmatprep.subr.mxu0 0.0
    %849 = vmatpush2.msra.mxu0 0.0
    %850 = vmatprep.subr.mxu0 0.0
    %851 = vmatpush2.msra.mxu0 0.0
    %852 = vmatprep.subr.mxu0 0.0
    %853 = vmatpush2.msra.mxu0 0.0
    %854 = vmatprep.subr.mxu0 0.0
    %855 = vmatpush2.msra.mxu0 0.0
    %856 = vmatprep.subr.mxu0 0.0
    %857 = vmatpush2.msra.mxu0 0.0
    %858 = vmatprep.subr.mxu0 0.0
    %859 = vmatpush2.msra.mxu0 0.0
    %860 = vmatprep.subr.mxu0 0.0
    %861 = vmatpush2.msra.mxu0 0.0
    %862 = vmatprep.subr.mxu0 0.0
    %863 = vmatpush2.msra.mxu0 0.0
    %864 = vmatprep.subr.mxu0 0.0
    %865 = vmatpush2.msra.mxu0 0.0
    %866 = vmatprep.subr.mxu0 0.0
    %867 = vmatpush2.msra.mxu0 0.0
    %868 = vmatprep.subr.mxu0 0.0
    %869 = vmatpush2.msra.mxu0 0.0
    %870 = vmatprep.mubr.f32.mxu0 0.0
    %871 = vmatmul.mubr.f32.gmra.mxu0 %v727
    %v872 = vpop.f32.mrf.mxu0
    %v873 = vadd.f32 0.0, %v872
    %v874 = vpop.f32.mrf.mxu0
    %v875 = vadd.f32 0.0, %v874
    %876 = vdwg.mxu0
    %v877 = vadd.f32 %v731, %v802
    %v878 = vadd.f32 %v732, %v804
    %v879 = vadd.f32 %v733, %v873
    %v880 = vadd.f32 %v734, %v875
    %v881 = vxor.u32 %v877, 2147483648
    %v882 = vmul.f32 %v881, 1.442695
    %v883 = vpow.pop %v882
    %v884 = vadd.f32 %v883, 1.0
    %v885 = vrcp.pop %v884
    %v886 = vmul.f32 1.0, %v885
    %v887 = vxor.u32 %v878, 2147483648
    %v888 = vmul.f32 %v887, 1.442695
    %v889 = vpow.pop %v888
    %v890 = vadd.f32 %v889, 1.0
    %v891 = vrcp.pop %v890
    %v892 = vmul.f32 1.0, %v891
    %v893 = vtanh.pop %v879
    %v894 = vxor.u32 %v880, 2147483648
    %v895 = vmul.f32 %v894, 1.442695
    %v896 = vpow.pop %v895
    %v897 = vadd.f32 %v896, 1.0
    %v898 = vrcp.pop %v897
    %v899 = vmul.f32 1.0, %v898
    %v900 = vmul.f32 %v892, %v725
    %v901 = vmul.f32 %v886, %v893
    %v902 = vadd.f32 %v900, %v901
    %v903 = vtanh.pop %v902
    %v904 = vmul.f32 %v899, %v903
    %v905 = vmax.f32 %v727, %v904
    %s906 = smul.u32 2, 4
    %s907 = smul.addr %s906, 8
    %s908 = scalar_lea.vmem [#allocation2], %s907
    %v909 = vld [vmem:[%s908] sm:$0xff]
    %v910 = vld [vmem:[%s908 + $0x8] sm:$0xff]
    %v911 = vld [vmem:[%s908 + $0x10] sm:$0xff]
    %v912 = vld [vmem:[%s908 + $0x18] sm:$0xff]
    %913 = vmatprep.subr.mxu0 %v548
    %914 = vmatpush1.msra.mxu0 %v547
    %915 = vmatprep.subr.mxu0 %v544
    %916 = vmatpush1.msra.mxu0 %v543
    %917 = vmatprep.subr.mxu0 %v540
    %918 = vmatpush1.msra.mxu0 %v539
    %919 = vmatprep.subr.mxu0 %v536
    %920 = vmatpush1.msra.mxu0 %v535
    %921 = vmatprep.subr.mxu0 %v532
    %922 = vmatpush1.msra.mxu0 %v531
    %923 = vmatprep.subr.mxu0 %v528
    %924 = vmatpush1.msra.mxu0 %v527
    %925 = vmatprep.subr.mxu0 %v524
    %926 = vmatpush1.msra.mxu0 %v523
    %927 = vmatprep.subr.mxu0 %v520
    %928 = vmatpush1.msra.mxu0 %v519
    %929 = vmatprep.subr.mxu0 %v516
    %930 = vmatpush1.msra.mxu0 %v515
    %931 = vmatprep.subr.mxu0 %v512
    %932 = vmatpush1.msra.mxu0 %v511
    %933 = vmatprep.subr.mxu0 %v508
    %934 = vmatpush1.msra.mxu0 %v507
    %935 = vmatprep.subr.mxu0 %v504
    %936 = vmatpush1.msra.mxu0 %v503
    %937 = vmatprep.subr.mxu0 %v500
    %938 = vmatpush1.msra.mxu0 %v499
    %939 = vmatprep.subr.mxu0 %v496
    %940 = vmatpush1.msra.mxu0 %v495
    %941 = vmatprep.subr.mxu0 %v492
    %942 = vmatpush1.msra.mxu0 %v491
    %943 = vmatprep.subr.mxu0 %v488
    %944 = vmatpush1.msra.mxu0 %v487
    %945 = vmatprep.subr.mxu0 0.0
    %946 = vmatpush2.msra.mxu0 0.0
    %947 = vmatprep.subr.mxu0 0.0
    %948 = vmatpush2.msra.mxu0 0.0
    %949 = vmatprep.subr.mxu0 0.0
    %950 = vmatpush2.msra.mxu0 0.0
    %951 = vmatprep.subr.mxu0 0.0
    %952 = vmatpush2.msra.mxu0 0.0
    %953 = vmatprep.subr.mxu0 0.0
    %954 = vmatpush2.msra.mxu0 0.0
    %955 = vmatprep.subr.mxu0 0.0
    %956 = vmatpush2.msra.mxu0 0.0
    %957 = vmatprep.subr.mxu0 0.0
    %958 = vmatpush2.msra.mxu0 0.0
    %959 = vmatprep.subr.mxu0 0.0
    %960 = vmatpush2.msra.mxu0 0.0
    %961 = vmatprep.subr.mxu0 0.0
    %962 = vmatpush2.msra.mxu0 0.0
    %963 = vmatprep.subr.mxu0 0.0
    %964 = vmatpush2.msra.mxu0 0.0
    %965 = vmatprep.subr.mxu0 0.0
    %966 = vmatpush2.msra.mxu0 0.0
    %967 = vmatprep.subr.mxu0 0.0
    %968 = vmatpush2.msra.mxu0 0.0
    %969 = vmatprep.subr.mxu0 0.0
    %970 = vmatpush2.msra.mxu0 0.0
    %971 = vmatprep.subr.mxu0 0.0
    %972 = vmatpush2.msra.mxu0 0.0
    %973 = vmatprep.subr.mxu0 0.0
    %974 = vmatpush2.msra.mxu0 0.0
    %975 = vmatprep.subr.mxu0 0.0
    %976 = vmatpush2.msra.mxu0 0.0
    %977 = vmatprep.mubr.f32.mxu0 0.0
    %978 = vmatmul.mubr.f32.gmra.mxu0 %v904
    %v979 = vpop.f32.mrf.mxu0
    %v980 = vadd.f32 0.0, %v979
    %v981 = vpop.f32.mrf.mxu0
    %v982 = vadd.f32 0.0, %v981
    %983 = vdwg.mxu0
    %984 = vmatprep.subr.mxu0 %v550
    %985 = vmatpush1.msra.mxu0 %v549
    %986 = vmatprep.subr.mxu0 %v546
    %987 = vmatpush1.msra.mxu0 %v545
    %988 = vmatprep.subr.mxu0 %v542
    %989 = vmatpush1.msra.mxu0 %v541
    %990 = vmatprep.subr.mxu0 %v538
    %991 = vmatpush1.msra.mxu0 %v537
    %992 = vmatprep.subr.mxu0 %v534
    %993 = vmatpush1.msra.mxu0 %v533
    %994 = vmatprep.subr.mxu0 %v530
    %995 = vmatpush1.msra.mxu0 %v529
    %996 = vmatprep.subr.mxu0 %v526
    %997 = vmatpush1.msra.mxu0 %v525
    %998 = vmatprep.subr.mxu0 %v522
    %999 = vmatpush1.msra.mxu0 %v521
    %1000 = vmatprep.subr.mxu0 %v518
    %1001 = vmatpush1.msra.mxu0 %v517
    %1002 = vmatprep.subr.mxu0 %v514
    %1003 = vmatpush1.msra.mxu0 %v513
    %1004 = vmatprep.subr.mxu0 %v510
    %1005 = vmatpush1.msra.mxu0 %v509
    %1006 = vmatprep.subr.mxu0 %v506
    %1007 = vmatpush1.msra.mxu0 %v505
    %1008 = vmatprep.subr.mxu0 %v502
    %1009 = vmatpush1.msra.mxu0 %v501
    %1010 = vmatprep.subr.mxu0 %v498
    %1011 = vmatpush1.msra.mxu0 %v497
    %1012 = vmatprep.subr.mxu0 %v494
    %1013 = vmatpush1.msra.mxu0 %v493
    %1014 = vmatprep.subr.mxu0 %v490
    %1015 = vmatpush1.msra.mxu0 %v489
    %1016 = vmatprep.subr.mxu0 0.0
    %1017 = vmatpush2.msra.mxu0 0.0
    %1018 = vmatprep.subr.mxu0 0.0
    %1019 = vmatpush2.msra.mxu0 0.0
    %1020 = vmatprep.subr.mxu0 0.0
    %1021 = vmatpush2.msra.mxu0 0.0
    %1022 = vmatprep.subr.mxu0 0.0
    %1023 = vmatpush2.msra.mxu0 0.0
    %1024 = vmatprep.subr.mxu0 0.0
    %1025 = vmatpush2.msra.mxu0 0.0
    %1026 = vmatprep.subr.mxu0 0.0
    %1027 = vmatpush2.msra.mxu0 0.0
    %1028 = vmatprep.subr.mxu0 0.0
    %1029 = vmatpush2.msra.mxu0 0.0
    %1030 = vmatprep.subr.mxu0 0.0
    %1031 = vmatpush2.msra.mxu0 0.0
    %1032 = vmatprep.subr.mxu0 0.0
    %1033 = vmatpush2.msra.mxu0 0.0
    %1034 = vmatprep.subr.mxu0 0.0
    %1035 = vmatpush2.msra.mxu0 0.0
    %1036 = vmatprep.subr.mxu0 0.0
    %1037 = vmatpush2.msra.mxu0 0.0
    %1038 = vmatprep.subr.mxu0 0.0
    %1039 = vmatpush2.msra.mxu0 0.0
    %1040 = vmatprep.subr.mxu0 0.0
    %1041 = vmatpush2.msra.mxu0 0.0
    %1042 = vmatprep.subr.mxu0 0.0
    %1043 = vmatpush2.msra.mxu0 0.0
    %1044 = vmatprep.subr.mxu0 0.0
    %1045 = vmatpush2.msra.mxu0 0.0
    %1046 = vmatprep.subr.mxu0 0.0
    %1047 = vmatpush2.msra.mxu0 0.0
    %1048 = vmatprep.mubr.f32.mxu0 0.0
    %1049 = vmatmul.mubr.f32.gmra.mxu0 %v904
    %v1050 = vpop.f32.mrf.mxu0
    %v1051 = vadd.f32 0.0, %v1050
    %v1052 = vpop.f32.mrf.mxu0
    %v1053 = vadd.f32 0.0, %v1052
    %1054 = vdwg.mxu0
    %v1055 = vadd.f32 %v909, %v980
    %v1056 = vadd.f32 %v910, %v982
    %v1057 = vadd.f32 %v911, %v1051
    %v1058 = vadd.f32 %v912, %v1053
    %v1059 = vxor.u32 %v1055, 2147483648
    %v1060 = vmul.f32 %v1059, 1.442695
    %v1061 = vpow.pop %v1060
    %v1062 = vadd.f32 %v1061, 1.0
    %v1063 = vrcp.pop %v1062
    %v1064 = vmul.f32 1.0, %v1063
    %v1065 = vxor.u32 %v1056, 2147483648
    %v1066 = vmul.f32 %v1065, 1.442695
    %v1067 = vpow.pop %v1066
    %v1068 = vadd.f32 %v1067, 1.0
    %v1069 = vrcp.pop %v1068
    %v1070 = vmul.f32 1.0, %v1069
    %v1071 = vtanh.pop %v1057
    %v1072 = vxor.u32 %v1058, 2147483648
    %v1073 = vmul.f32 %v1072, 1.442695
    %v1074 = vpow.pop %v1073
    %v1075 = vadd.f32 %v1074, 1.0
    %v1076 = vrcp.pop %v1075
    %v1077 = vmul.f32 1.0, %v1076
    %v1078 = vmul.f32 %v1070, %v902
    %v1079 = vmul.f32 %v1064, %v1071
    %v1080 = vadd.f32 %v1078, %v1079
    %v1081 = vtanh.pop %v1080
    %v1082 = vmul.f32 %v1077, %v1081
    %v1083 = vmax.f32 %v905, %v1082
    %s1084 = smul.u32 3, 4
    %s1085 = smul.addr %s1084, 8
    %s1086 = scalar_lea.vmem [#allocation2], %s1085
    %v1087 = vld [vmem:[%s1086] sm:$0xff]
    %v1088 = vld [vmem:[%s1086 + $0x8] sm:$0xff]
    %v1089 = vld [vmem:[%s1086 + $0x10] sm:$0xff]
    %v1090 = vld [vmem:[%s1086 + $0x18] sm:$0xff]
    %1091 = vmatprep.subr.mxu0 %v548
    %1092 = vmatpush1.msra.mxu0 %v547
    %1093 = vmatprep.subr.mxu0 %v544
    %1094 = vmatpush1.msra.mxu0 %v543
    %1095 = vmatprep.subr.mxu0 %v540
    %1096 = vmatpush1.msra.mxu0 %v539
    %1097 = vmatprep.subr.mxu0 %v536
    %1098 = vmatpush1.msra.mxu0 %v535
    %1099 = vmatprep.subr.mxu0 %v532
    %1100 = vmatpush1.msra.mxu0 %v531
    %1101 = vmatprep.subr.mxu0 %v528
    %1102 = vmatpush1.msra.mxu0 %v527
    %1103 = vmatprep.subr.mxu0 %v524
    %1104 = vmatpush1.msra.mxu0 %v523
    %1105 = vmatprep.subr.mxu0 %v520
    %1106 = vmatpush1.msra.mxu0 %v519
    %1107 = vmatprep.subr.mxu0 %v516
    %1108 = vmatpush1.msra.mxu0 %v515
    %1109 = vmatprep.subr.mxu0 %v512
    %1110 = vmatpush1.msra.mxu0 %v511
    %1111 = vmatprep.subr.mxu0 %v508
    %1112 = vmatpush1.msra.mxu0 %v507
    %1113 = vmatprep.subr.mxu0 %v504
    %1114 = vmatpush1.msra.mxu0 %v503
    %1115 = vmatprep.subr.mxu0 %v500
    %1116 = vmatpush1.msra.mxu0 %v499
    %1117 = vmatprep.subr.mxu0 %v496
    %1118 = vmatpush1.msra.mxu0 %v495
    %1119 = vmatprep.subr.mxu0 %v492
    %1120 = vmatpush1.msra.mxu0 %v491
    %1121 = vmatprep.subr.mxu0 %v488
    %1122 = vmatpush1.msra.mxu0 %v487
    %1123 = vmatprep.subr.mxu0 0.0
    %1124 = vmatpush2.msra.mxu0 0.0
    %1125 = vmatprep.subr.mxu0 0.0
    %1126 = vmatpush2.msra.mxu0 0.0
    %1127 = vmatprep.subr.mxu0 0.0
    %1128 = vmatpush2.msra.mxu0 0.0
    %1129 = vmatprep.subr.mxu0 0.0
    %1130 = vmatpush2.msra.mxu0 0.0
    %1131 = vmatprep.subr.mxu0 0.0
    %1132 = vmatpush2.msra.mxu0 0.0
    %1133 = vmatprep.subr.mxu0 0.0
    %1134 = vmatpush2.msra.mxu0 0.0
    %1135 = vmatprep.subr.mxu0 0.0
    %1136 = vmatpush2.msra.mxu0 0.0
    %1137 = vmatprep.subr.mxu0 0.0
    %1138 = vmatpush2.msra.mxu0 0.0
    %1139 = vmatprep.subr.mxu0 0.0
    %1140 = vmatpush2.msra.mxu0 0.0
    %1141 = vmatprep.subr.mxu0 0.0
    %1142 = vmatpush2.msra.mxu0 0.0
    %1143 = vmatprep.subr.mxu0 0.0
    %1144 = vmatpush2.msra.mxu0 0.0
    %1145 = vmatprep.subr.mxu0 0.0
    %1146 = vmatpush2.msra.mxu0 0.0
    %1147 = vmatprep.subr.mxu0 0.0
    %1148 = vmatpush2.msra.mxu0 0.0
    %1149 = vmatprep.subr.mxu0 0.0
    %1150 = vmatpush2.msra.mxu0 0.0
    %1151 = vmatprep.subr.mxu0 0.0
    %1152 = vmatpush2.msra.mxu0 0.0
    %1153 = vmatprep.subr.mxu0 0.0
    %1154 = vmatpush2.msra.mxu0 0.0
    %1155 = vmatprep.mubr.f32.mxu0 0.0
    %1156 = vmatmul.mubr.f32.gmra.mxu0 %v1082
    %v1157 = vpop.f32.mrf.mxu0
    %v1158 = vadd.f32 0.0, %v1157
    %v1159 = vpop.f32.mrf.mxu0
    %v1160 = vadd.f32 0.0, %v1159
    %1161 = vdwg.mxu0
    %1162 = vmatprep.subr.mxu0 %v550
    %1163 = vmatpush1.msra.mxu0 %v549
    %1164 = vmatprep.subr.mxu0 %v546
    %1165 = vmatpush1.msra.mxu0 %v545
    %1166 = vmatprep.subr.mxu0 %v542
    %1167 = vmatpush1.msra.mxu0 %v541
    %1168 = vmatprep.subr.mxu0 %v538
    %1169 = vmatpush1.msra.mxu0 %v537
    %1170 = vmatprep.subr.mxu0 %v534
    %1171 = vmatpush1.msra.mxu0 %v533
    %1172 = vmatprep.subr.mxu0 %v530
    %1173 = vmatpush1.msra.mxu0 %v529
    %1174 = vmatprep.subr.mxu0 %v526
    %1175 = vmatpush1.msra.mxu0 %v525
    %1176 = vmatprep.subr.mxu0 %v522
    %1177 = vmatpush1.msra.mxu0 %v521
    %1178 = vmatprep.subr.mxu0 %v518
    %1179 = vmatpush1.msra.mxu0 %v517
    %1180 = vmatprep.subr.mxu0 %v514
    %1181 = vmatpush1.msra.mxu0 %v513
    %1182 = vmatprep.subr.mxu0 %v510
    %1183 = vmatpush1.msra.mxu0 %v509
    %1184 = vmatprep.subr.mxu0 %v506
    %1185 = vmatpush1.msra.mxu0 %v505
    %1186 = vmatprep.subr.mxu0 %v502
    %1187 = vmatpush1.msra.mxu0 %v501
    %1188 = vmatprep.subr.mxu0 %v498
    %1189 = vmatpush1.msra.mxu0 %v497
    %1190 = vmatprep.subr.mxu0 %v494
    %1191 = vmatpush1.msra.mxu0 %v493
    %1192 = vmatprep.subr.mxu0 %v490
    %1193 = vmatpush1.msra.mxu0 %v489
    %1194 = vmatprep.subr.mxu0 0.0
    %1195 = vmatpush2.msra.mxu0 0.0
    %1196 = vmatprep.subr.mxu0 0.0
    %1197 = vmatpush2.msra.mxu0 0.0
    %1198 = vmatprep.subr.mxu0 0.0
    %1199 = vmatpush2.msra.mxu0 0.0
    %1200 = vmatprep.subr.mxu0 0.0
    %1201 = vmatpush2.msra.mxu0 0.0
    %1202 = vmatprep.subr.mxu0 0.0
    %1203 = vmatpush2.msra.mxu0 0.0
    %1204 = vmatprep.subr.mxu0 0.0
    %1205 = vmatpush2.msra.mxu0 0.0
    %1206 = vmatprep.subr.mxu0 0.0
    %1207 = vmatpush2.msra.mxu0 0.0
    %1208 = vmatprep.subr.mxu0 0.0
    %1209 = vmatpush2.msra.mxu0 0.0
    %1210 = vmatprep.subr.mxu0 0.0
    %1211 = vmatpush2.msra.mxu0 0.0
    %1212 = vmatprep.subr.mxu0 0.0
    %1213 = vmatpush2.msra.mxu0 0.0
    %1214 = vmatprep.subr.mxu0 0.0
    %1215 = vmatpush2.msra.mxu0 0.0
    %1216 = vmatprep.subr.mxu0 0.0
    %1217 = vmatpush2.msra.mxu0 0.0
    %1218 = vmatprep.subr.mxu0 0.0
    %1219 = vmatpush2.msra.mxu0 0.0
    %1220 = vmatprep.subr.mxu0 0.0
    %1221 = vmatpush2.msra.mxu0 0.0
    %1222 = vmatprep.subr.mxu0 0.0
    %1223 = vmatpush2.msra.mxu0 0.0
    %1224 = vmatprep.subr.mxu0 0.0
    %1225 = vmatpush2.msra.mxu0 0.0
    %1226 = vmatprep.mubr.f32.mxu0 0.0
    %1227 = vmatmul.mubr.f32.gmra.mxu0 %v1082
    %v1228 = vpop.f32.mrf.mxu0
    %v1229 = vadd.f32 0.0, %v1228
    %v1230 = vpop.f32.mrf.mxu0
    %v1231 = vadd.f32 0.0, %v1230
    %1232 = vdwg.mxu0
    %v1233 = vadd.f32 %v1087, %v1158
    %v1234 = vadd.f32 %v1088, %v1160
    %v1235 = vadd.f32 %v1089, %v1229
    %v1236 = vadd.f32 %v1090, %v1231
    %v1237 = vxor.u32 %v1233, 2147483648
    %v1238 = vmul.f32 %v1237, 1.442695
    %v1239 = vpow.pop %v1238
    %v1240 = vadd.f32 %v1239, 1.0
    %v1241 = vrcp.pop %v1240
    %v1242 = vmul.f32 1.0, %v1241
    %v1243 = vxor.u32 %v1234, 2147483648
    %v1244 = vmul.f32 %v1243, 1.442695
    %v1245 = vpow.pop %v1244
    %v1246 = vadd.f32 %v1245, 1.0
    %v1247 = vrcp.pop %v1246
    %v1248 = vmul.f32 1.0, %v1247
    %v1249 = vtanh.pop %v1235
    %v1250 = vxor.u32 %v1236, 2147483648
    %v1251 = vmul.f32 %v1250, 1.442695
    %v1252 = vpow.pop %v1251
    %v1253 = vadd.f32 %v1252, 1.0
    %v1254 = vrcp.pop %v1253
    %v1255 = vmul.f32 1.0, %v1254
    %v1256 = vmul.f32 %v1248, %v1080
    %v1257 = vmul.f32 %v1242, %v1249
    %v1258 = vadd.f32 %v1256, %v1257
    %v1259 = vtanh.pop %v1258
    %v1260 = vmul.f32 %v1255, %v1259
    %v1261 = vmax.f32 %v1083, %v1260
    %s1262 = smul.u32 4, 4
    %s1263 = smul.addr %s1262, 8
    %s1264 = scalar_lea.vmem [#allocation2], %s1263
    %v1265 = vld [vmem:[%s1264] sm:$0xff]
    %v1266 = vld [vmem:[%s1264 + $0x8] sm:$0xff]
    %v1267 = vld [vmem:[%s1264 + $0x10] sm:$0xff]
    %v1268 = vld [vmem:[%s1264 + $0x18] sm:$0xff]
    %1269 = vmatprep.subr.mxu0 %v548
    %1270 = vmatpush1.msra.mxu0 %v547
    %1271 = vmatprep.subr.mxu0 %v544
    %1272 = vmatpush1.msra.mxu0 %v543
    %1273 = vmatprep.subr.mxu0 %v540
    %1274 = vmatpush1.msra.mxu0 %v539
    %1275 = vmatprep.subr.mxu0 %v536
    %1276 = vmatpush1.msra.mxu0 %v535
    %1277 = vmatprep.subr.mxu0 %v532
    %1278 = vmatpush1.msra.mxu0 %v531
    %1279 = vmatprep.subr.mxu0 %v528
    %1280 = vmatpush1.msra.mxu0 %v527
    %1281 = vmatprep.subr.mxu0 %v524
    %1282 = vmatpush1.msra.mxu0 %v523
    %1283 = vmatprep.subr.mxu0 %v520
    %1284 = vmatpush1.msra.mxu0 %v519
    %1285 = vmatprep.subr.mxu0 %v516
    %1286 = vmatpush1.msra.mxu0 %v515
    %1287 = vmatprep.subr.mxu0 %v512
    %1288 = vmatpush1.msra.mxu0 %v511
    %1289 = vmatprep.subr.mxu0 %v508
    %1290 = vmatpush1.msra.mxu0 %v507
    %1291 = vmatprep.subr.mxu0 %v504
    %1292 = vmatpush1.msra.mxu0 %v503
    %1293 = vmatprep.subr.mxu0 %v500
    %1294 = vmatpush1.msra.mxu0 %v499
    %1295 = vmatprep.subr.mxu0 %v496
    %1296 = vmatpush1.msra.mxu0 %v495
    %1297 = vmatprep.subr.mxu0 %v492
    %1298 = vmatpush1.msra.mxu0 %v491
    %1299 = vmatprep.subr.mxu0 %v488
    %1300 = vmatpush1.msra.mxu0 %v487
    %1301 = vmatprep.subr.mxu0 0.0
    %1302 = vmatpush2.msra.mxu0 0.0
    %1303 = vmatprep.subr.mxu0 0.0
    %1304 = vmatpush2.msra.mxu0 0.0
    %1305 = vmatprep.subr.mxu0 0.0
    %1306 = vmatpush2.msra.mxu0 0.0
    %1307 = vmatprep.subr.mxu0 0.0
    %1308 = vmatpush2.msra.mxu0 0.0
    %1309 = vmatprep.subr.mxu0 0.0
    %1310 = vmatpush2.msra.mxu0 0.0
    %1311 = vmatprep.subr.mxu0 0.0
    %1312 = vmatpush2.msra.mxu0 0.0
    %1313 = vmatprep.subr.mxu0 0.0
    %1314 = vmatpush2.msra.mxu0 0.0
    %1315 = vmatprep.subr.mxu0 0.0
    %1316 = vmatpush2.msra.mxu0 0.0
    %1317 = vmatprep.subr.mxu0 0.0
    %1318 = vmatpush2.msra.mxu0 0.0
    %1319 = vmatprep.subr.mxu0 0.0
    %1320 = vmatpush2.msra.mxu0 0.0
    %1321 = vmatprep.subr.mxu0 0.0
    %1322 = vmatpush2.msra.mxu0 0.0
    %1323 = vmatprep.subr.mxu0 0.0
    %1324 = vmatpush2.msra.mxu0 0.0
    %1325 = vmatprep.subr.mxu0 0.0
    %1326 = vmatpush2.msra.mxu0 0.0
    %1327 = vmatprep.subr.mxu0 0.0
    %1328 = vmatpush2.msra.mxu0 0.0
    %1329 = vmatprep.subr.mxu0 0.0
    %1330 = vmatpush2.msra.mxu0 0.0
    %1331 = vmatprep.subr.mxu0 0.0
    %1332 = vmatpush2.msra.mxu0 0.0
    %1333 = vmatprep.mubr.f32.mxu0 0.0
    %1334 = vmatmul.mubr.f32.gmra.mxu0 %v1260
    %v1335 = vpop.f32.mrf.mxu0
    %v1336 = vadd.f32 0.0, %v1335
    %v1337 = vpop.f32.mrf.mxu0
    %v1338 = vadd.f32 0.0, %v1337
    %1339 = vdwg.mxu0
    %1340 = vmatprep.subr.mxu0 %v550
    %1341 = vmatpush1.msra.mxu0 %v549
    %1342 = vmatprep.subr.mxu0 %v546
    %1343 = vmatpush1.msra.mxu0 %v545
    %1344 = vmatprep.subr.mxu0 %v542
    %1345 = vmatpush1.msra.mxu0 %v541
    %1346 = vmatprep.subr.mxu0 %v538
    %1347 = vmatpush1.msra.mxu0 %v537
    %1348 = vmatprep.subr.mxu0 %v534
    %1349 = vmatpush1.msra.mxu0 %v533
    %1350 = vmatprep.subr.mxu0 %v530
    %1351 = vmatpush1.msra.mxu0 %v529
    %1352 = vmatprep.subr.mxu0 %v526
    %1353 = vmatpush1.msra.mxu0 %v525
    %1354 = vmatprep.subr.mxu0 %v522
    %1355 = vmatpush1.msra.mxu0 %v521
    %1356 = vmatprep.subr.mxu0 %v518
    %1357 = vmatpush1.msra.mxu0 %v517
    %1358 = vmatprep.subr.mxu0 %v514
    %1359 = vmatpush1.msra.mxu0 %v513
    %1360 = vmatprep.subr.mxu0 %v510
    %1361 = vmatpush1.msra.mxu0 %v509
    %1362 = vmatprep.subr.mxu0 %v506
    %1363 = vmatpush1.msra.mxu0 %v505
    %1364 = vmatprep.subr.mxu0 %v502
    %1365 = vmatpush1.msra.mxu0 %v501
    %1366 = vmatprep.subr.mxu0 %v498
    %1367 = vmatpush1.msra.mxu0 %v497
    %1368 = vmatprep.subr.mxu0 %v494
    %1369 = vmatpush1.msra.mxu0 %v493
    %1370 = vmatprep.subr.mxu0 %v490
    %1371 = vmatpush1.msra.mxu0 %v489
    %1372 = vmatprep.subr.mxu0 0.0
    %1373 = vmatpush2.msra.mxu0 0.0
    %1374 = vmatprep.subr.mxu0 0.0
    %1375 = vmatpush2.msra.mxu0 0.0
    %1376 = vmatprep.subr.mxu0 0.0
    %1377 = vmatpush2.msra.mxu0 0.0
    %1378 = vmatprep.subr.mxu0 0.0
    %1379 = vmatpush2.msra.mxu0 0.0
    %1380 = vmatprep.subr.mxu0 0.0
    %1381 = vmatpush2.msra.mxu0 0.0
    %1382 = vmatprep.subr.mxu0 0.0
    %1383 = vmatpush2.msra.mxu0 0.0
    %1384 = vmatprep.subr.mxu0 0.0
    %1385 = vmatpush2.msra.mxu0 0.0
    %1386 = vmatprep.subr.mxu0 0.0
    %1387 = vmatpush2.msra.mxu0 0.0
    %1388 = vmatprep.subr.mxu0 0.0
    %1389 = vmatpush2.msra.mxu0 0.0
    %1390 = vmatprep.subr.mxu0 0.0
    %1391 = vmatpush2.msra.mxu0 0.0
    %1392 = vmatprep.subr.mxu0 0.0
    %1393 = vmatpush2.msra.mxu0 0.0
    %1394 = vmatprep.subr.mxu0 0.0
    %1395 = vmatpush2.msra.mxu0 0.0
    %1396 = vmatprep.subr.mxu0 0.0
    %1397 = vmatpush2.msra.mxu0 0.0
    %1398 = vmatprep.subr.mxu0 0.0
    %1399 = vmatpush2.msra.mxu0 0.0
    %1400 = vmatprep.subr.mxu0 0.0
    %1401 = vmatpush2.msra.mxu0 0.0
    %1402 = vmatprep.subr.mxu0 0.0
    %1403 = vmatpush2.msra.mxu0 0.0
    %1404 = vmatprep.mubr.f32.mxu0 0.0
    %1405 = vmatmul.mubr.f32.gmra.mxu0 %v1260
    %v1406 = vpop.f32.mrf.mxu0
    %v1407 = vadd.f32 0.0, %v1406
    %v1408 = vpop.f32.mrf.mxu0
    %v1409 = vadd.f32 0.0, %v1408
    %1410 = vdwg.mxu0
    %v1411 = vadd.f32 %v1265, %v1336
    %v1412 = vadd.f32 %v1266, %v1338
    %v1413 = vadd.f32 %v1267, %v1407
    %v1414 = vadd.f32 %v1268, %v1409
    %v1415 = vxor.u32 %v1411, 2147483648
    %v1416 = vmul.f32 %v1415, 1.442695
    %v1417 = vpow.pop %v1416
    %v1418 = vadd.f32 %v1417, 1.0
    %v1419 = vrcp.pop %v1418
    %v1420 = vmul.f32 1.0, %v1419
    %v1421 = vxor.u32 %v1412, 2147483648
    %v1422 = vmul.f32 %v1421, 1.442695
    %v1423 = vpow.pop %v1422
    %v1424 = vadd.f32 %v1423, 1.0
    %v1425 = vrcp.pop %v1424
    %v1426 = vmul.f32 1.0, %v1425
    %v1427 = vtanh.pop %v1413
    %v1428 = vxor.u32 %v1414, 2147483648
    %v1429 = vmul.f32 %v1428, 1.442695
    %v1430 = vpow.pop %v1429
    %v1431 = vadd.f32 %v1430, 1.0
    %v1432 = vrcp.pop %v1431
    %v1433 = vmul.f32 1.0, %v1432
    %v1434 = vmul.f32 %v1426, %v1258
    %v1435 = vmul.f32 %v1420, %v1427
    %v1436 = vadd.f32 %v1434, %v1435
    %v1437 = vtanh.pop %v1436
    %v1438 = vmul.f32 %v1433, %v1437
    %v1439 = vmax.f32 %v1261, %v1438
    %s1440 = smul.u32 5, 4
    %s1441 = smul.addr %s1440, 8
    %s1442 = scalar_lea.vmem [#allocation2], %s1441
    %v1443 = vld [vmem:[%s1442] sm:$0xff]
    %v1444 = vld [vmem:[%s1442 + $0x8] sm:$0xff]
    %v1445 = vld [vmem:[%s1442 + $0x10] sm:$0xff]
    %v1446 = vld [vmem:[%s1442 + $0x18] sm:$0xff]
    %1447 = vmatprep.subr.mxu0 %v548
    %1448 = vmatpush1.msra.mxu0 %v547
    %1449 = vmatprep.subr.mxu0 %v544
    %1450 = vmatpush1.msra.mxu0 %v543
    %1451 = vmatprep.subr.mxu0 %v540
    %1452 = vmatpush1.msra.mxu0 %v539
    %1453 = vmatprep.subr.mxu0 %v536
    %1454 = vmatpush1.msra.mxu0 %v535
    %1455 = vmatprep.subr.mxu0 %v532
    %1456 = vmatpush1.msra.mxu0 %v531
    %1457 = vmatprep.subr.mxu0 %v528
    %1458 = vmatpush1.msra.mxu0 %v527
    %1459 = vmatprep.subr.mxu0 %v524
    %1460 = vmatpush1.msra.mxu0 %v523
    %1461 = vmatprep.subr.mxu0 %v520
    %1462 = vmatpush1.msra.mxu0 %v519
    %1463 = vmatprep.subr.mxu0 %v516
    %1464 = vmatpush1.msra.mxu0 %v515
    %1465 = vmatprep.subr.mxu0 %v512
    %1466 = vmatpush1.msra.mxu0 %v511
    %1467 = vmatprep.subr.mxu0 %v508
    %1468 = vmatpush1.msra.mxu0 %v507
    %1469 = vmatprep.subr.mxu0 %v504
    %1470 = vmatpush1.msra.mxu0 %v503
    %1471 = vmatprep.subr.mxu0 %v500
    %1472 = vmatpush1.msra.mxu0 %v499
    %1473 = vmatprep.subr.mxu0 %v496
    %1474 = vmatpush1.msra.mxu0 %v495
    %1475 = vmatprep.subr.mxu0 %v492
    %1476 = vmatpush1.msra.mxu0 %v491
    %1477 = vmatprep.subr.mxu0 %v488
    %1478 = vmatpush1.msra.mxu0 %v487
    %1479 = vmatprep.subr.mxu0 0.0
    %1480 = vmatpush2.msra.mxu0 0.0
    %1481 = vmatprep.subr.mxu0 0.0
    %1482 = vmatpush2.msra.mxu0 0.0
    %1483 = vmatprep.subr.mxu0 0.0
    %1484 = vmatpush2.msra.mxu0 0.0
    %1485 = vmatprep.subr.mxu0 0.0
    %1486 = vmatpush2.msra.mxu0 0.0
    %1487 = vmatprep.subr.mxu0 0.0
    %1488 = vmatpush2.msra.mxu0 0.0
    %1489 = vmatprep.subr.mxu0 0.0
    %1490 = vmatpush2.msra.mxu0 0.0
    %1491 = vmatprep.subr.mxu0 0.0
    %1492 = vmatpush2.msra.mxu0 0.0
    %1493 = vmatprep.subr.mxu0 0.0
    %1494 = vmatpush2.msra.mxu0 0.0
    %1495 = vmatprep.subr.mxu0 0.0
    %1496 = vmatpush2.msra.mxu0 0.0
    %1497 = vmatprep.subr.mxu0 0.0
    %1498 = vmatpush2.msra.mxu0 0.0
    %1499 = vmatprep.subr.mxu0 0.0
    %1500 = vmatpush2.msra.mxu0 0.0
    %1501 = vmatprep.subr.mxu0 0.0
    %1502 = vmatpush2.msra.mxu0 0.0
    %1503 = vmatprep.subr.mxu0 0.0
    %1504 = vmatpush2.msra.mxu0 0.0
    %1505 = vmatprep.subr.mxu0 0.0
    %1506 = vmatpush2.msra.mxu0 0.0
    %1507 = vmatprep.subr.mxu0 0.0
    %1508 = vmatpush2.msra.mxu0 0.0
    %1509 = vmatprep.subr.mxu0 0.0
    %1510 = vmatpush2.msra.mxu0 0.0
    %1511 = vmatprep.mubr.f32.mxu0 0.0
    %1512 = vmatmul.mubr.f32.gmra.mxu0 %v1438
    %v1513 = vpop.f32.mrf.mxu0
    %v1514 = vadd.f32 0.0, %v1513
    %v1515 = vpop.f32.mrf.mxu0
    %v1516 = vadd.f32 0.0, %v1515
    %1517 = vdwg.mxu0
    %1518 = vmatprep.subr.mxu0 %v550
    %1519 = vmatpush1.msra.mxu0 %v549
    %1520 = vmatprep.subr.mxu0 %v546
    %1521 = vmatpush1.msra.mxu0 %v545
    %1522 = vmatprep.subr.mxu0 %v542
    %1523 = vmatpush1.msra.mxu0 %v541
    %1524 = vmatprep.subr.mxu0 %v538
    %1525 = vmatpush1.msra.mxu0 %v537
    %1526 = vmatprep.subr.mxu0 %v534
    %1527 = vmatpush1.msra.mxu0 %v533
    %1528 = vmatprep.subr.mxu0 %v530
    %1529 = vmatpush1.msra.mxu0 %v529
    %1530 = vmatprep.subr.mxu0 %v526
    %1531 = vmatpush1.msra.mxu0 %v525
    %1532 = vmatprep.subr.mxu0 %v522
    %1533 = vmatpush1.msra.mxu0 %v521
    %1534 = vmatprep.subr.mxu0 %v518
    %1535 = vmatpush1.msra.mxu0 %v517
    %1536 = vmatprep.subr.mxu0 %v514
    %1537 = vmatpush1.msra.mxu0 %v513
    %1538 = vmatprep.subr.mxu0 %v510
    %1539 = vmatpush1.msra.mxu0 %v509
    %1540 = vmatprep.subr.mxu0 %v506
    %1541 = vmatpush1.msra.mxu0 %v505
    %1542 = vmatprep.subr.mxu0 %v502
    %1543 = vmatpush1.msra.mxu0 %v501
    %1544 = vmatprep.subr.mxu0 %v498
    %1545 = vmatpush1.msra.mxu0 %v497
    %1546 = vmatprep.subr.mxu0 %v494
    %1547 = vmatpush1.msra.mxu0 %v493
    %1548 = vmatprep.subr.mxu0 %v490
    %1549 = vmatpush1.msra.mxu0 %v489
    %1550 = vmatprep.subr.mxu0 0.0
    %1551 = vmatpush2.msra.mxu0 0.0
    %1552 = vmatprep.subr.mxu0 0.0
    %1553 = vmatpush2.msra.mxu0 0.0
    %1554 = vmatprep.subr.mxu0 0.0
    %1555 = vmatpush2.msra.mxu0 0.0
    %1556 = vmatprep.subr.mxu0 0.0
    %1557 = vmatpush2.msra.mxu0 0.0
    %1558 = vmatprep.subr.mxu0 0.0
    %1559 = vmatpush2.msra.mxu0 0.0
    %1560 = vmatprep.subr.mxu0 0.0
    %1561 = vmatpush2.msra.mxu0 0.0
    %1562 = vmatprep.subr.mxu0 0.0
    %1563 = vmatpush2.msra.mxu0 0.0
    %1564 = vmatprep.subr.mxu0 0.0
    %1565 = vmatpush2.msra.mxu0 0.0
    %1566 = vmatprep.subr.mxu0 0.0
    %1567 = vmatpush2.msra.mxu0 0.0
    %1568 = vmatprep.subr.mxu0 0.0
    %1569 = vmatpush2.msra.mxu0 0.0
    %1570 = vmatprep.subr.mxu0 0.0
    %1571 = vmatpush2.msra.mxu0 0.0
    %1572 = vmatprep.subr.mxu0 0.0
    %1573 = vmatpush2.msra.mxu0 0.0
    %1574 = vmatprep.subr.mxu0 0.0
    %1575 = vmatpush2.msra.mxu0 0.0
    %1576 = vmatprep.subr.mxu0 0.0
    %1577 = vmatpush2.msra.mxu0 0.0
    %1578 = vmatprep.subr.mxu0 0.0
    %1579 = vmatpush2.msra.mxu0 0.0
    %1580 = vmatprep.subr.mxu0 0.0
    %1581 = vmatpush2.msra.mxu0 0.0
    %1582 = vmatprep.mubr.f32.mxu0 0.0
    %1583 = vmatmul.mubr.f32.gmra.mxu0 %v1438
    %v1584 = vpop.f32.mrf.mxu0
    %v1585 = vadd.f32 0.0, %v1584
    %v1586 = vpop.f32.mrf.mxu0
    %v1587 = vadd.f32 0.0, %v1586
    %1588 = vdwg.mxu0
    %v1589 = vadd.f32 %v1443, %v1514
    %v1590 = vadd.f32 %v1444, %v1516
    %v1591 = vadd.f32 %v1445, %v1585
    %v1592 = vadd.f32 %v1446, %v1587
    %v1593 = vxor.u32 %v1589, 2147483648
    %v1594 = vmul.f32 %v1593, 1.442695
    %v1595 = vpow.pop %v1594
    %v1596 = vadd.f32 %v1595, 1.0
    %v1597 = vrcp.pop %v1596
    %v1598 = vmul.f32 1.0, %v1597
    %v1599 = vxor.u32 %v1590, 2147483648
    %v1600 = vmul.f32 %v1599, 1.442695
    %v1601 = vpow.pop %v1600
    %v1602 = vadd.f32 %v1601, 1.0
    %v1603 = vrcp.pop %v1602
    %v1604 = vmul.f32 1.0, %v1603
    %v1605 = vtanh.pop %v1591
    %v1606 = vxor.u32 %v1592, 2147483648
    %v1607 = vmul.f32 %v1606, 1.442695
    %v1608 = vpow.pop %v1607
    %v1609 = vadd.f32 %v1608, 1.0
    %v1610 = vrcp.pop %v1609
    %v1611 = vmul.f32 1.0, %v1610
    %v1612 = vmul.f32 %v1604, %v1436
    %v1613 = vmul.f32 %v1598, %v1605
    %v1614 = vadd.f32 %v1612, %v1613
    %v1615 = vtanh.pop %v1614
    %v1616 = vmul.f32 %v1611, %v1615
    %v1617 = vmax.f32 %v1439, %v1616
    %s1618 = smul.u32 6, 4
    %s1619 = smul.addr %s1618, 8
    %s1620 = scalar_lea.vmem [#allocation2], %s1619
    %v1621 = vld [vmem:[%s1620] sm:$0xff]
    %v1622 = vld [vmem:[%s1620 + $0x8] sm:$0xff]
    %v1623 = vld [vmem:[%s1620 + $0x10] sm:$0xff]
    %v1624 = vld [vmem:[%s1620 + $0x18] sm:$0xff]
    %1625 = vmatprep.subr.mxu0 %v548
    %1626 = vmatpush1.msra.mxu0 %v547
    %1627 = vmatprep.subr.mxu0 %v544
    %1628 = vmatpush1.msra.mxu0 %v543
    %1629 = vmatprep.subr.mxu0 %v540
    %1630 = vmatpush1.msra.mxu0 %v539
    %1631 = vmatprep.subr.mxu0 %v536
    %1632 = vmatpush1.msra.mxu0 %v535
    %1633 = vmatprep.subr.mxu0 %v532
    %1634 = vmatpush1.msra.mxu0 %v531
    %1635 = vmatprep.subr.mxu0 %v528
    %1636 = vmatpush1.msra.mxu0 %v527
    %1637 = vmatprep.subr.mxu0 %v524
    %1638 = vmatpush1.msra.mxu0 %v523
    %1639 = vmatprep.subr.mxu0 %v520
    %1640 = vmatpush1.msra.mxu0 %v519
    %1641 = vmatprep.subr.mxu0 %v516
    %1642 = vmatpush1.msra.mxu0 %v515
    %1643 = vmatprep.subr.mxu0 %v512
    %1644 = vmatpush1.msra.mxu0 %v511
    %1645 = vmatprep.subr.mxu0 %v508
    %1646 = vmatpush1.msra.mxu0 %v507
    %1647 = vmatprep.subr.mxu0 %v504
    %1648 = vmatpush1.msra.mxu0 %v503
    %1649 = vmatprep.subr.mxu0 %v500
    %1650 = vmatpush1.msra.mxu0 %v499
    %1651 = vmatprep.subr.mxu0 %v496
    %1652 = vmatpush1.msra.mxu0 %v495
    %1653 = vmatprep.subr.mxu0 %v492
    %1654 = vmatpush1.msra.mxu0 %v491
    %1655 = vmatprep.subr.mxu0 %v488
    %1656 = vmatpush1.msra.mxu0 %v487
    %1657 = vmatprep.subr.mxu0 0.0
    %1658 = vmatpush2.msra.mxu0 0.0
    %1659 = vmatprep.subr.mxu0 0.0
    %1660 = vmatpush2.msra.mxu0 0.0
    %1661 = vmatprep.subr.mxu0 0.0
    %1662 = vmatpush2.msra.mxu0 0.0
    %1663 = vmatprep.subr.mxu0 0.0
    %1664 = vmatpush2.msra.mxu0 0.0
    %1665 = vmatprep.subr.mxu0 0.0
    %1666 = vmatpush2.msra.mxu0 0.0
    %1667 = vmatprep.subr.mxu0 0.0
    %1668 = vmatpush2.msra.mxu0 0.0
    %1669 = vmatprep.subr.mxu0 0.0
    %1670 = vmatpush2.msra.mxu0 0.0
    %1671 = vmatprep.subr.mxu0 0.0
    %1672 = vmatpush2.msra.mxu0 0.0
    %1673 = vmatprep.subr.mxu0 0.0
    %1674 = vmatpush2.msra.mxu0 0.0
    %1675 = vmatprep.subr.mxu0 0.0
    %1676 = vmatpush2.msra.mxu0 0.0
    %1677 = vmatprep.subr.mxu0 0.0
    %1678 = vmatpush2.msra.mxu0 0.0
    %1679 = vmatprep.subr.mxu0 0.0
    %1680 = vmatpush2.msra.mxu0 0.0
    %1681 = vmatprep.subr.mxu0 0.0
    %1682 = vmatpush2.msra.mxu0 0.0
    %1683 = vmatprep.subr.mxu0 0.0
    %1684 = vmatpush2.msra.mxu0 0.0
    %1685 = vmatprep.subr.mxu0 0.0
    %1686 = vmatpush2.msra.mxu0 0.0
    %1687 = vmatprep.subr.mxu0 0.0
    %1688 = vmatpush2.msra.mxu0 0.0
    %1689 = vmatprep.mubr.f32.mxu0 0.0
    %1690 = vmatmul.mubr.f32.gmra.mxu0 %v1616
    %v1691 = vpop.f32.mrf.mxu0
    %v1692 = vadd.f32 0.0, %v1691
    %v1693 = vpop.f32.mrf.mxu0
    %v1694 = vadd.f32 0.0, %v1693
    %1695 = vdwg.mxu0
    %1696 = vmatprep.subr.mxu0 %v550
    %1697 = vmatpush1.msra.mxu0 %v549
    %1698 = vmatprep.subr.mxu0 %v546
    %1699 = vmatpush1.msra.mxu0 %v545
    %1700 = vmatprep.subr.mxu0 %v542
    %1701 = vmatpush1.msra.mxu0 %v541
    %1702 = vmatprep.subr.mxu0 %v538
    %1703 = vmatpush1.msra.mxu0 %v537
    %1704 = vmatprep.subr.mxu0 %v534
    %1705 = vmatpush1.msra.mxu0 %v533
    %1706 = vmatprep.subr.mxu0 %v530
    %1707 = vmatpush1.msra.mxu0 %v529
    %1708 = vmatprep.subr.mxu0 %v526
    %1709 = vmatpush1.msra.mxu0 %v525
    %1710 = vmatprep.subr.mxu0 %v522
    %1711 = vmatpush1.msra.mxu0 %v521
    %1712 = vmatprep.subr.mxu0 %v518
    %1713 = vmatpush1.msra.mxu0 %v517
    %1714 = vmatprep.subr.mxu0 %v514
    %1715 = vmatpush1.msra.mxu0 %v513
    %1716 = vmatprep.subr.mxu0 %v510
    %1717 = vmatpush1.msra.mxu0 %v509
    %1718 = vmatprep.subr.mxu0 %v506
    %1719 = vmatpush1.msra.mxu0 %v505
    %1720 = vmatprep.subr.mxu0 %v502
    %1721 = vmatpush1.msra.mxu0 %v501
    %1722 = vmatprep.subr.mxu0 %v498
    %1723 = vmatpush1.msra.mxu0 %v497
    %1724 = vmatprep.subr.mxu0 %v494
    %1725 = vmatpush1.msra.mxu0 %v493
    %1726 = vmatprep.subr.mxu0 %v490
    %1727 = vmatpush1.msra.mxu0 %v489
    %1728 = vmatprep.subr.mxu0 0.0
    %1729 = vmatpush2.msra.mxu0 0.0
    %1730 = vmatprep.subr.mxu0 0.0
    %1731 = vmatpush2.msra.mxu0 0.0
    %1732 = vmatprep.subr.mxu0 0.0
    %1733 = vmatpush2.msra.mxu0 0.0
    %1734 = vmatprep.subr.mxu0 0.0
    %1735 = vmatpush2.msra.mxu0 0.0
    %1736 = vmatprep.subr.mxu0 0.0
    %1737 = vmatpush2.msra.mxu0 0.0
    %1738 = vmatprep.subr.mxu0 0.0
    %1739 = vmatpush2.msra.mxu0 0.0
    %1740 = vmatprep.subr.mxu0 0.0
    %1741 = vmatpush2.msra.mxu0 0.0
    %1742 = vmatprep.subr.mxu0 0.0
    %1743 = vmatpush2.msra.mxu0 0.0
    %1744 = vmatprep.subr.mxu0 0.0
    %1745 = vmatpush2.msra.mxu0 0.0
    %1746 = vmatprep.subr.mxu0 0.0
    %1747 = vmatpush2.msra.mxu0 0.0
    %1748 = vmatprep.subr.mxu0 0.0
    %1749 = vmatpush2.msra.mxu0 0.0
    %1750 = vmatprep.subr.mxu0 0.0
    %1751 = vmatpush2.msra.mxu0 0.0
    %1752 = vmatprep.subr.mxu0 0.0
    %1753 = vmatpush2.msra.mxu0 0.0
    %1754 = vmatprep.subr.mxu0 0.0
    %1755 = vmatpush2.msra.mxu0 0.0
    %1756 = vmatprep.subr.mxu0 0.0
    %1757 = vmatpush2.msra.mxu0 0.0
    %1758 = vmatprep.subr.mxu0 0.0
    %1759 = vmatpush2.msra.mxu0 0.0
    %1760 = vmatprep.mubr.f32.mxu0 0.0
    %1761 = vmatmul.mubr.f32.gmra.mxu0 %v1616
    %v1762 = vpop.f32.mrf.mxu0
    %v1763 = vadd.f32 0.0, %v1762
    %v1764 = vpop.f32.mrf.mxu0
    %v1765 = vadd.f32 0.0, %v1764
    %1766 = vdwg.mxu0
    %v1767 = vadd.f32 %v1621, %v1692
    %v1768 = vadd.f32 %v1622, %v1694
    %v1769 = vadd.f32 %v1623, %v1763
    %v1770 = vadd.f32 %v1624, %v1765
    %v1771 = vxor.u32 %v1767, 2147483648
    %v1772 = vmul.f32 %v1771, 1.442695
    %v1773 = vpow.pop %v1772
    %v1774 = vadd.f32 %v1773, 1.0
    %v1775 = vrcp.pop %v1774
    %v1776 = vmul.f32 1.0, %v1775
    %v1777 = vxor.u32 %v1768, 2147483648
    %v1778 = vmul.f32 %v1777, 1.442695
    %v1779 = vpow.pop %v1778
    %v1780 = vadd.f32 %v1779, 1.0
    %v1781 = vrcp.pop %v1780
    %v1782 = vmul.f32 1.0, %v1781
    %v1783 = vtanh.pop %v1769
    %v1784 = vxor.u32 %v1770, 2147483648
    %v1785 = vmul.f32 %v1784, 1.442695
    %v1786 = vpow.pop %v1785
    %v1787 = vadd.f32 %v1786, 1.0
    %v1788 = vrcp.pop %v1787
    %v1789 = vmul.f32 1.0, %v1788
    %v1790 = vmul.f32 %v1782, %v1614
    %v1791 = vmul.f32 %v1776, %v1783
    %v1792 = vadd.f32 %v1790, %v1791
    %v1793 = vtanh.pop %v1792
    %v1794 = vmul.f32 %v1789, %v1793
    %v1795 = vmax.f32 %v1617, %v1794
    %s1796 = smul.u32 7, 4
    %s1797 = smul.addr %s1796, 8
    %s1798 = scalar_lea.vmem [#allocation2], %s1797
    %v1799 = vld [vmem:[%s1798] sm:$0xff]
    %v1800 = vld [vmem:[%s1798 + $0x8] sm:$0xff]
    %v1801 = vld [vmem:[%s1798 + $0x10] sm:$0xff]
    %v1802 = vld [vmem:[%s1798 + $0x18] sm:$0xff]
    %1803 = vmatprep.subr.mxu0 %v548
    %1804 = vmatpush1.msra.mxu0 %v547
    %1805 = vmatprep.subr.mxu0 %v544
    %1806 = vmatpush1.msra.mxu0 %v543
    %1807 = vmatprep.subr.mxu0 %v540
    %1808 = vmatpush1.msra.mxu0 %v539
    %1809 = vmatprep.subr.mxu0 %v536
    %1810 = vmatpush1.msra.mxu0 %v535
    %1811 = vmatprep.subr.mxu0 %v532
    %1812 = vmatpush1.msra.mxu0 %v531
    %1813 = vmatprep.subr.mxu0 %v528
    %1814 = vmatpush1.msra.mxu0 %v527
    %1815 = vmatprep.subr.mxu0 %v524
    %1816 = vmatpush1.msra.mxu0 %v523
    %1817 = vmatprep.subr.mxu0 %v520
    %1818 = vmatpush1.msra.mxu0 %v519
    %1819 = vmatprep.subr.mxu0 %v516
    %1820 = vmatpush1.msra.mxu0 %v515
    %1821 = vmatprep.subr.mxu0 %v512
    %1822 = vmatpush1.msra.mxu0 %v511
    %1823 = vmatprep.subr.mxu0 %v508
    %1824 = vmatpush1.msra.mxu0 %v507
    %1825 = vmatprep.subr.mxu0 %v504
    %1826 = vmatpush1.msra.mxu0 %v503
    %1827 = vmatprep.subr.mxu0 %v500
    %1828 = vmatpush1.msra.mxu0 %v499
    %1829 = vmatprep.subr.mxu0 %v496
    %1830 = vmatpush1.msra.mxu0 %v495
    %1831 = vmatprep.subr.mxu0 %v492
    %1832 = vmatpush1.msra.mxu0 %v491
    %1833 = vmatprep.subr.mxu0 %v488
    %1834 = vmatpush1.msra.mxu0 %v487
    %1835 = vmatprep.subr.mxu0 0.0
    %1836 = vmatpush2.msra.mxu0 0.0
    %1837 = vmatprep.subr.mxu0 0.0
    %1838 = vmatpush2.msra.mxu0 0.0
    %1839 = vmatprep.subr.mxu0 0.0
    %1840 = vmatpush2.msra.mxu0 0.0
    %1841 = vmatprep.subr.mxu0 0.0
    %1842 = vmatpush2.msra.mxu0 0.0
    %1843 = vmatprep.subr.mxu0 0.0
    %1844 = vmatpush2.msra.mxu0 0.0
    %1845 = vmatprep.subr.mxu0 0.0
    %1846 = vmatpush2.msra.mxu0 0.0
    %1847 = vmatprep.subr.mxu0 0.0
    %1848 = vmatpush2.msra.mxu0 0.0
    %1849 = vmatprep.subr.mxu0 0.0
    %1850 = vmatpush2.msra.mxu0 0.0
    %1851 = vmatprep.subr.mxu0 0.0
    %1852 = vmatpush2.msra.mxu0 0.0
    %1853 = vmatprep.subr.mxu0 0.0
    %1854 = vmatpush2.msra.mxu0 0.0
    %1855 = vmatprep.subr.mxu0 0.0
    %1856 = vmatpush2.msra.mxu0 0.0
    %1857 = vmatprep.subr.mxu0 0.0
    %1858 = vmatpush2.msra.mxu0 0.0
    %1859 = vmatprep.subr.mxu0 0.0
    %1860 = vmatpush2.msra.mxu0 0.0
    %1861 = vmatprep.subr.mxu0 0.0
    %1862 = vmatpush2.msra.mxu0 0.0
    %1863 = vmatprep.subr.mxu0 0.0
    %1864 = vmatpush2.msra.mxu0 0.0
    %1865 = vmatprep.subr.mxu0 0.0
    %1866 = vmatpush2.msra.mxu0 0.0
    %1867 = vmatprep.mubr.f32.mxu0 0.0
    %1868 = vmatmul.mubr.f32.gmra.mxu0 %v1794
    %v1869 = vpop.f32.mrf.mxu0
    %v1870 = vadd.f32 0.0, %v1869
    %v1871 = vpop.f32.mrf.mxu0
    %v1872 = vadd.f32 0.0, %v1871
    %1873 = vdwg.mxu0
    %1874 = vmatprep.subr.mxu0 %v550
    %1875 = vmatpush1.msra.mxu0 %v549
    %1876 = vmatprep.subr.mxu0 %v546
    %1877 = vmatpush1.msra.mxu0 %v545
    %1878 = vmatprep.subr.mxu0 %v542
    %1879 = vmatpush1.msra.mxu0 %v541
    %1880 = vmatprep.subr.mxu0 %v538
    %1881 = vmatpush1.msra.mxu0 %v537
    %1882 = vmatprep.subr.mxu0 %v534
    %1883 = vmatpush1.msra.mxu0 %v533
    %1884 = vmatprep.subr.mxu0 %v530
    %1885 = vmatpush1.msra.mxu0 %v529
    %1886 = vmatprep.subr.mxu0 %v526
    %1887 = vmatpush1.msra.mxu0 %v525
    %1888 = vmatprep.subr.mxu0 %v522
    %1889 = vmatpush1.msra.mxu0 %v521
    %1890 = vmatprep.subr.mxu0 %v518
    %1891 = vmatpush1.msra.mxu0 %v517
    %1892 = vmatprep.subr.mxu0 %v514
    %1893 = vmatpush1.msra.mxu0 %v513
    %1894 = vmatprep.subr.mxu0 %v510
    %1895 = vmatpush1.msra.mxu0 %v509
    %1896 = vmatprep.subr.mxu0 %v506
    %1897 = vmatpush1.msra.mxu0 %v505
    %1898 = vmatprep.subr.mxu0 %v502
    %1899 = vmatpush1.msra.mxu0 %v501
    %1900 = vmatprep.subr.mxu0 %v498
    %1901 = vmatpush1.msra.mxu0 %v497
    %1902 = vmatprep.subr.mxu0 %v494
    %1903 = vmatpush1.msra.mxu0 %v493
    %1904 = vmatprep.subr.mxu0 %v490
    %1905 = vmatpush1.msra.mxu0 %v489
    %1906 = vmatprep.subr.mxu0 0.0
    %1907 = vmatpush2.msra.mxu0 0.0
    %1908 = vmatprep.subr.mxu0 0.0
    %1909 = vmatpush2.msra.mxu0 0.0
    %1910 = vmatprep.subr.mxu0 0.0
    %1911 = vmatpush2.msra.mxu0 0.0
    %1912 = vmatprep.subr.mxu0 0.0
    %1913 = vmatpush2.msra.mxu0 0.0
    %1914 = vmatprep.subr.mxu0 0.0
    %1915 = vmatpush2.msra.mxu0 0.0
    %1916 = vmatprep.subr.mxu0 0.0
    %1917 = vmatpush2.msra.mxu0 0.0
    %1918 = vmatprep.subr.mxu0 0.0
    %1919 = vmatpush2.msra.mxu0 0.0
    %1920 = vmatprep.subr.mxu0 0.0
    %1921 = vmatpush2.msra.mxu0 0.0
    %1922 = vmatprep.subr.mxu0 0.0
    %1923 = vmatpush2.msra.mxu0 0.0
    %1924 = vmatprep.subr.mxu0 0.0
    %1925 = vmatpush2.msra.mxu0 0.0
    %1926 = vmatprep.subr.mxu0 0.0
    %1927 = vmatpush2.msra.mxu0 0.0
    %1928 = vmatprep.subr.mxu0 0.0
    %1929 = vmatpush2.msra.mxu0 0.0
    %1930 = vmatprep.subr.mxu0 0.0
    %1931 = vmatpush2.msra.mxu0 0.0
    %1932 = vmatprep.subr.mxu0 0.0
    %1933 = vmatpush2.msra.mxu0 0.0
    %1934 = vmatprep.subr.mxu0 0.0
    %1935 = vmatpush2.msra.mxu0 0.0
    %1936 = vmatprep.subr.mxu0 0.0
    %1937 = vmatpush2.msra.mxu0 0.0
    %1938 = vmatprep.mubr.f32.mxu0 0.0
    %1939 = vmatmul.mubr.f32.gmra.mxu0 %v1794
    %v1940 = vpop.f32.mrf.mxu0
    %v1941 = vadd.f32 0.0, %v1940
    %v1942 = vpop.f32.mrf.mxu0
    %v1943 = vadd.f32 0.0, %v1942
    %1944 = vdwg.mxu0
    %v1945 = vadd.f32 %v1799, %v1870
    %v1946 = vadd.f32 %v1800, %v1872
    %v1947 = vadd.f32 %v1801, %v1941
    %v1948 = vadd.f32 %v1802, %v1943
    %v1949 = vxor.u32 %v1945, 2147483648
    %v1950 = vmul.f32 %v1949, 1.442695
    %v1951 = vpow.pop %v1950
    %v1952 = vadd.f32 %v1951, 1.0
    %v1953 = vrcp.pop %v1952
    %v1954 = vmul.f32 1.0, %v1953
    %v1955 = vxor.u32 %v1946, 2147483648
    %v1956 = vmul.f32 %v1955, 1.442695
    %v1957 = vpow.pop %v1956
    %v1958 = vadd.f32 %v1957, 1.0
    %v1959 = vrcp.pop %v1958
    %v1960 = vmul.f32 1.0, %v1959
    %v1961 = vtanh.pop %v1947
    %v1962 = vxor.u32 %v1948, 2147483648
    %v1963 = vmul.f32 %v1962, 1.442695
    %v1964 = vpow.pop %v1963
    %v1965 = vadd.f32 %v1964, 1.0
    %v1966 = vrcp.pop %v1965
    %v1967 = vmul.f32 1.0, %v1966
    %v1968 = vmul.f32 %v1960, %v1792
    %v1969 = vmul.f32 %v1954, %v1961
    %v1970 = vadd.f32 %v1968, %v1969
    %v1971 = vtanh.pop %v1970
    %v1972 = vmul.f32 %v1967, %v1971
    %v1973 = vmax.f32 %v1795, %v1972
    %v1974 = vtanh.pop %v1973
    %v1975 = vtanh.pop %v1974
    %1976 = vst [vmem:[#allocation12] sm:$0xff] %v1975
    %v1977 = vld [vmem:[#allocation9] sm:$0xff]
    %v1978 = vld [vmem:[#allocation9 + $0x8] sm:$0xff]
    %v1979 = vld [vmem:[#allocation9 + $0x10] sm:$0xff]
    %v1980 = vld [vmem:[#allocation9 + $0x18] sm:$0xff]
    %v1981 = vld [vmem:[#allocation9 + $0x20] sm:$0xff]
    %v1982 = vld [vmem:[#allocation9 + $0x28] sm:$0xff]
    %v1983 = vld [vmem:[#allocation9 + $0x30] sm:$0xff]
    %v1984 = vld [vmem:[#allocation9 + $0x38] sm:$0xff]
    %v1985 = vld [vmem:[#allocation9 + $0x40] sm:$0xff]
    %v1986 = vld [vmem:[#allocation9 + $0x48] sm:$0xff]
    %v1987 = vld [vmem:[#allocation9 + $0x50] sm:$0xff]
    %v1988 = vld [vmem:[#allocation9 + $0x58] sm:$0xff]
    %v1989 = vld [vmem:[#allocation9 + $0x60] sm:$0xff]
    %v1990 = vld [vmem:[#allocation9 + $0x68] sm:$0xff]
    %v1991 = vld [vmem:[#allocation9 + $0x70] sm:$0xff]
    %v1992 = vld [vmem:[#allocation9 + $0x78] sm:$0xff]
    %v1993 = vld [vmem:[%s5] sm:$0x1]
    %v1995 = vlaneseq
    %v1996 = vshrl.u32 %v1995, 7
    %v1997 = vsub.s32 0, %v1996
    %v1998 = vrot.slane %v1993, %v1997
    %2000 = vmatprep.subr.mxu0 0.0
    %2001 = vmatpush1.msra.mxu0 %v1992
    %2002 = vmatprep.subr.mxu0 0.0
    %2003 = vmatpush1.msra.mxu0 %v1991
    %2004 = vmatprep.subr.mxu0 0.0
    %2005 = vmatpush1.msra.mxu0 %v1990
    %2006 = vmatprep.subr.mxu0 0.0
    %2007 = vmatpush1.msra.mxu0 %v1989
    %2008 = vmatprep.subr.mxu0 0.0
    %2009 = vmatpush1.msra.mxu0 %v1988
    %2010 = vmatprep.subr.mxu0 0.0
    %2011 = vmatpush1.msra.mxu0 %v1987
    %2012 = vmatprep.subr.mxu0 0.0
    %2013 = vmatpush1.msra.mxu0 %v1986
    %2014 = vmatprep.subr.mxu0 0.0
    %2015 = vmatpush1.msra.mxu0 %v1985
    %2016 = vmatprep.subr.mxu0 0.0
    %2017 = vmatpush1.msra.mxu0 %v1984
    %2018 = vmatprep.subr.mxu0 0.0
    %2019 = vmatpush1.msra.mxu0 %v1983
    %2020 = vmatprep.subr.mxu0 0.0
    %2021 = vmatpush1.msra.mxu0 %v1982
    %2022 = vmatprep.subr.mxu0 0.0
    %2023 = vmatpush1.msra.mxu0 %v1981
    %2024 = vmatprep.subr.mxu0 0.0
    %2025 = vmatpush1.msra.mxu0 %v1980
    %2026 = vmatprep.subr.mxu0 0.0
    %2027 = vmatpush1.msra.mxu0 %v1979
    %2028 = vmatprep.subr.mxu0 0.0
    %2029 = vmatpush1.msra.mxu0 %v1978
    %2030 = vmatprep.subr.mxu0 0.0
    %2031 = vmatpush1.msra.mxu0 %v1977
    %2032 = vmatprep.subr.mxu0 0.0
    %2033 = vmatpush2.msra.mxu0 0.0
    %2034 = vmatprep.subr.mxu0 0.0
    %2035 = vmatpush2.msra.mxu0 0.0
    %2036 = vmatprep.subr.mxu0 0.0
    %2037 = vmatpush2.msra.mxu0 0.0
    %2038 = vmatprep.subr.mxu0 0.0
    %2039 = vmatpush2.msra.mxu0 0.0
    %2040 = vmatprep.subr.mxu0 0.0
    %2041 = vmatpush2.msra.mxu0 0.0
    %2042 = vmatprep.subr.mxu0 0.0
    %2043 = vmatpush2.msra.mxu0 0.0
    %2044 = vmatprep.subr.mxu0 0.0
    %2045 = vmatpush2.msra.mxu0 0.0
    %2046 = vmatprep.subr.mxu0 0.0
    %2047 = vmatpush2.msra.mxu0 0.0
    %2048 = vmatprep.subr.mxu0 0.0
    %2049 = vmatpush2.msra.mxu0 0.0
    %2050 = vmatprep.subr.mxu0 0.0
    %2051 = vmatpush2.msra.mxu0 0.0
    %2052 = vmatprep.subr.mxu0 0.0
    %2053 = vmatpush2.msra.mxu0 0.0
    %2054 = vmatprep.subr.mxu0 0.0
    %2055 = vmatpush2.msra.mxu0 0.0
    %2056 = vmatprep.subr.mxu0 0.0
    %2057 = vmatpush2.msra.mxu0 0.0
    %2058 = vmatprep.subr.mxu0 0.0
    %2059 = vmatpush2.msra.mxu0 0.0
    %2060 = vmatprep.subr.mxu0 0.0
    %2061 = vmatpush2.msra.mxu0 0.0
    %2062 = vmatprep.subr.mxu0 0.0
    %2063 = vmatpush2.msra.mxu0 0.0
    %2064 = vmatprep.mubr.f32.mxu0 0.0
    %2065 = vmatmul.mubr.f32.gmra.mxu0 %v1975
    %v2066 = vpop.f32.mrf.mxu0
    %v2067 = vadd.f32 %v1998, %v2066
    %v2068 = vpop.f32.mrf.mxu0
    %2069 = vdwg.mxu0
    %v2070 = vlaneseq
    %v2071 = vand.u32 %v2070, 127
    %vm2072 = vcmp.lt.s32.totalorder %v2071, 4
    %v2073 = vsel %vm2072, %v2067, -inf
    %2074 = vmax.xlane.f32.xlu0 %v2073
    %v2075 = vpop.xlane.xlu0 %2074
    %v2076 = vsub.f32 %v2073, %v2075
    %v2077 = vmul.f32 %v2076, 1.442695
    %v2078 = vpow.pop %v2077
    %2079 = vadd.xlane.f32.xlu0 %v2078
    %v2080 = vpop.xlane.xlu0 %2079
    %v2081 = vrcp.pop %v2080
    %v2082 = vmul.f32 %v2078, %v2081
    %2083 = vst [vmem:[#allocation11] sm:$0xff] %v2082
    // Predicated region
    $region42: #{tpu_custom_call.1} parent=1 // pred_check
      _
    $region43: #{tpu_custom_call.1} parent=1 // pred_check_branch
      %2085 = sbr.rel (0) target = $region45
    $region44: #{tpu_custom_call.1} parent=1 // pred_region
      %s2087 = ssub.s32 128, 128
      %2088 = vsyncadd [#allocation5], %s2087
      %s2090 = sshll.u32 [#allocation11], 4
      %s2091 = int_to_ptr.vmem [resolvable:$true] %s2090
      %2093 = dma.vmem_to_hbm [thread:$0]  %s2091, 128, %s6, [#allocation5]
    $region45: #{tpu_custom_call.1} parent=1 // pred_fallthru
      _
    // Predicated region
    $region46: #{tpu_custom_call.1} parent=1 // pred_check
      _
    $region47: #{tpu_custom_call.1} parent=1 // pred_check_branch
      %2095 = sbr.rel (0) target = $region49
    $region48: #{tpu_custom_call.1} parent=1 // pred_region
      %s2097 = ssub.s32 128, 128
      %2098 = vsyncadd [#allocation13], %s2097
      %s2100 = sshll.u32 [#allocation12], 4
      %s2101 = int_to_ptr.vmem [resolvable:$true] %s2100
      %2103 = dma.vmem_to_hbm [thread:$0]  %s2101, 128, %s7, [#allocation13]
    $region49: #{tpu_custom_call.1} parent=1 // pred_fallthru
      _
    // Predicated region
    $region50: #{tpu_custom_call.1} parent=1 // pred_check
      _
    $region51: #{tpu_custom_call.1} parent=1 // pred_check_branch
      %2105 = sbr.rel (0) target = $region53
    $region52: #{tpu_custom_call.1} parent=1 // pred_region
      %2106 = dma.done [#allocation5], 128
    $region53: #{tpu_custom_call.1} parent=1 // pred_fallthru
      _
    // Predicated region
    $region54: #{tpu_custom_call.1} parent=1 // pred_check
      _
    $region55: #{tpu_custom_call.1} parent=1 // pred_check_branch
      %2108 = sbr.rel (0) target = $region57
    $region56: #{tpu_custom_call.1} parent=1 // pred_region
      %2109 = dma.done [#allocation13], 128
    $region57: #{tpu_custom_call.1} parent=1 // pred_fallthru
      _
    %2110 = vsyncpa [#allocation4], 1
    %2111 = vsyncpa [#allocation7], 1
    %2112 = vsyncpa [#allocation10], 1
    %2113 = vsyncpa [#allocation5], 1
    %2114 = vsyncpa [#allocation13], 1

</llo_original>
